<compile_context>
chip_gen: v7x
topology: tpu7x:2x2x1
jax: 0.10.0
libtpu: 0.0.40
codegen_flags: <defaults>
</compile_context>

<pallas_src>
import functools

import jax
import jax.numpy as jnp
from jax import lax
from jax.experimental import pallas as pl
from jax.experimental.pallas import tpu as pltpu

EPS = 1e-5


def _dws_bn_relu_stage(x_slabs, w_ref, mcol0, mcolL, mrow0, mrowL, *,
                       H, W, Cin, Cout, dw_base, pw_base, g_idx, b_idx):
  """One (depthwise 3x3 pad=1 -> pointwise 1x1 -> BN(train) -> ReLU) stage.

  x_slabs: list (len N) of (Cin, H*W) f32 slabs, spatial flattened on the lane axis.
  w_ref  : packed weight ref of shape (rows, Cmax, 1); rows addressed via *_base / *_idx.
  mcol0  : (1, HW) keep-mask, 0 where column == 0
  mcolL  : (1, HW) keep-mask, 0 where column == W - 1
  mrow0  : (1, HW) keep-mask, 0 where row == 0
  mrowL  : (1, HW) keep-mask, 0 where row == H - 1
  """
  HW = H * W
  n_batch = len(x_slabs)

  # Tiny column-vector weights, read once per stage (leading-dim index, no lane slicing).
  taps = [w_ref[dw_base + k, 0:Cin, :] for k in range(9)]           # (Cin, 1) each
  pw_cols = [w_ref[pw_base + ci, 0:Cout, :] for ci in range(Cin)]   # (Cout, 1) each
  gamma = w_ref[g_idx, 0:Cout, :]                                   # (Cout, 1)
  beta = w_ref[b_idx, 0:Cout, :]                                    # (Cout, 1)

  y_slabs = []
  s1 = None  # per-channel sum        (Cout, 1)
  s2 = None  # per-channel sum-of-sq  (Cout, 1)
  for x in x_slabs:
    # Source-side column masking: after the lane roll, dx=-1 taps would read column W-1 of
    # the previous row and dx=+1 taps column 0 of the next row; zero those sources once.
    src = {-1: x * mcolL, 0: x, 1: x * mcol0}

    # Depthwise 3x3 as 9 rolled FMAs (rolls on the XLU slot, FMAs on the VPU).
    acc = None
    for ky in range(3):
      dy = ky - 1
      part = None
      for kx in range(3):
        dx = kx - 1
        s = dy * W + dx                       # need shifted[p] == src[p + s]
        v = src[dx]
        if s % HW != 0:
          v = pltpu.roll(v, (-s) % HW, axis=1)
        term = v * taps[ky * 3 + kx]
        part = term if part is None else part + term
      # Destination-side row masking (also kills any roll wrap-around for this group).
      if dy == -1:
        part = part * mrow0
      elif dy == 1:
        part = part * mrowL
      acc = part if acc is None else acc + part

    # Pointwise 1x1: Cin broadcast-FMAs on the VPU (channel counts too small for the MXU).
    y = None
    for ci in range(Cin):
      term = acc[ci:ci + 1, :] * pw_cols[ci]        # (1,HW) * (Cout,1) -> (Cout,HW)
      y = term if y is None else y + term
    y_slabs.append(y)

    r1 = jnp.sum(y, axis=1, keepdims=True)
    r2 = jnp.sum(y * y, axis=1, keepdims=True)
    s1 = r1 if s1 is None else s1 + r1
    s2 = r2 if s2 is None else s2 + r2

  # BatchNorm2d training mode: batch stats over (N, H, W), biased variance, single pass.
  # NOTE: E[x^2] - E[x]^2 in f32 is cancellation-prone if |mean| >> std; fine at this scale.
  inv_cnt = 1.0 / float(n_batch * HW)
  mean = s1 * inv_cnt
  var = s2 * inv_cnt - mean * mean
  scale = gamma * lax.rsqrt(var + EPS)              # folded BN affine
  shift = beta - mean * scale
  return [jnp.maximum(y * scale + shift, 0.0) for y in y_slabs]


def _fused_block_kernel(x_ref, masks_ref, w_ref, o_ref, *, N, H, W, Cin, Cout,
                        dw1_base, pw1_base, dw2_base, pw2_base, gb_base):
  mcol0 = masks_ref[0]          # (1, HW)
  mcolL = masks_ref[1]
  mrow0 = masks_ref[2]
  mrowL = masks_ref[3]

  x_slabs = [x_ref[n] for n in range(N)]            # (Cin, HW) per sample

  h1 = _dws_bn_relu_stage(x_slabs, w_ref, mcol0, mcolL, mrow0, mrowL,
                          H=H, W=W, Cin=Cin, Cout=Cout,
                          dw_base=dw1_base, pw_base=pw1_base,
                          g_idx=gb_base + 0, b_idx=gb_base + 1)
  h2 = _dws_bn_relu_stage(h1, w_ref, mcol0, mcolL, mrow0, mrowL,
                          H=H, W=W, Cin=Cout, Cout=Cout,
                          dw_base=dw2_base, pw_base=pw2_base,
                          g_idx=gb_base + 2, b_idx=gb_base + 3)
  for n in range(N):
    o_ref[n] = h2[n]                                # lane-dense store (minor dim HW >= 128)


def _full_spec(shape):
  zeros = (0,) * len(shape)
  return pl.BlockSpec(shape, lambda i: zeros)


@jax.jit
def dws_conv_bn_relu_block(x_nchw, params):
  """Forward of DWSConvBnReluBlock. Input/output are NCHW (PyTorch convention)."""
  N, Cin, H, W = x_nchw.shape
  Cout = params["pw1"].shape[0]
  HW = H * W
  Cmax = max(Cin, Cout)

  # NCHW -> (N, C, H*W): free contiguous reshape, no transpose / pad in HBM.
  x = x_nchw.reshape(N, Cin, HW).astype(jnp.float32)

  # Edge keep-masks, packed into one tiny input (DMA #2).
  idx = jnp.arange(HW, dtype=jnp.int32)
  col = idx % W
  row = idx // W
  masks = jnp.stack([col != 0, col != W - 1, row != 0, row != H - 1]
                    ).astype(jnp.float32).reshape(4, 1, HW)

  # All weights + BN affines packed into one (rows, Cmax, 1) array (DMA #3).
  def _padc(a):
    a = a.astype(jnp.float32)
    return jnp.pad(a, ((0, 0), (0, Cmax - a.shape[1])))

  dw1 = _padc(params["dw1"].T)   # (9,   Cmax)  row k = tap (ky,kx) = (k//3, k%3)
  pw1 = _padc(params["pw1"].T)   # (Cin, Cmax)  row ci = weights for all Cout
  dw2 = _padc(params["dw2"].T)   # (9,   Cmax)
  pw2 = _padc(params["pw2"].T)   # (Cout,Cmax)
  gb = _padc(jnp.stack([params["g1"], params["b1"], params["g2"], params["b2"]]))
  megaw = jnp.concatenate([dw1, pw1, dw2, pw2, gb], axis=0)[..., None]

  dw1_base = 0
  pw1_base = 9
  dw2_base = pw1_base + Cin
  pw2_base = dw2_base + 9
  gb_base = pw2_base + Cout

  kernel = functools.partial(
      _fused_block_kernel, N=N, H=H, W=W, Cin=Cin, Cout=Cout,
      dw1_base=dw1_base, pw1_base=pw1_base, dw2_base=dw2_base,
      pw2_base=pw2_base, gb_base=gb_base)

  out = pl.pallas_call(
      kernel,
      grid=(1,),
      out_shape=jax.ShapeDtypeStruct((N, Cout, HW), jnp.float32),
      in_specs=[_full_spec(x.shape), _full_spec(masks.shape), _full_spec(megaw.shape)],
      out_specs=_full_spec((N, Cout, HW)),
      compiler_params=pltpu.CompilerParams(dimension_semantics=("arbitrary",)),
  )(x, masks, megaw)

  return out.reshape(N, Cout, H, W)


# ----------------------------- reference (pure JAX, NCHW) -----------------------------
def _ref_stage(x, w_dw_oihw, w_pw_oihw, gamma, beta):
  cin = x.shape[1]
  dn = ("NCHW", "OIHW", "NCHW")
  y = lax.conv_general_dilated(x, w_dw_oihw, (1, 1), ((1, 1), (1, 1)),
                               feature_group_count=cin, dimension_numbers=dn)
  y = lax.conv_general_dilated(y, w_pw_oihw, (1, 1), "VALID", dimension_numbers=dn)
  mean = jnp.mean(y, axis=(0, 2, 3), keepdims=True)
  var = jnp.mean(jnp.square(y - mean), axis=(0, 2, 3), keepdims=True)
  y = (y - mean) * lax.rsqrt(var + EPS)
  y = y * gamma.reshape(1, -1, 1, 1) + beta.reshape(1, -1, 1, 1)
  return jnp.maximum(y, 0.0)


def _ref_block(x, torch_params):
  p = torch_params
  y = _ref_stage(x, p["dw1"], p["pw1"], p["g1"], p["b1"])
  y = _ref_stage(y, p["dw2"], p["pw2"], p["g2"], p["b2"])
  return y


if __name__ == "__main__":
  key = jax.random.PRNGKey(0)
  N, Cin, H, W = 2, 4, 16, 16
  Cout = 8

  k_x, k1, k2, k3, k4 = jax.random.split(key, 5)
  x = jax.random.normal(k_x, (N, Cin, H, W), jnp.float32)

  # PyTorch-layout weights, then repacked for the kernel.
  w_dw1 = jax.random.normal(k1, (Cin, 1, 3, 3), jnp.float32) * 0.3      # depthwise 1
  w_pw1 = jax.random.normal(k2, (Cout, Cin, 1, 1), jnp.float32) * 0.3   # pointwise 1
  w_dw2 = jax.random.normal(k3, (Cout, 1, 3, 3), jnp.float32) * 0.3     # depthwise 2
  w_pw2 = jax.random.normal(k4, (Cout, Cout, 1, 1), jnp.float32) * 0.3  # pointwise 2
  g1 = jnp.ones((Cout,), jnp.float32); b1 = jnp.zeros((Cout,), jnp.float32)
  g2 = jnp.ones((Cout,), jnp.float32); b2 = jnp.zeros((Cout,), jnp.float32)

  def repack_dw(w_oihw):  # (C,1,3,3) -> (C, 9), column k = (ky, kx) = (k//3, k%3)
    return w_oihw[:, 0].reshape(w_oihw.shape[0], 9)

  def repack_pw(w_oihw):  # (Cout,Cin,1,1) -> (Cout, Cin)
    return w_oihw[:, :, 0, 0]

  params = {
      "dw1": repack_dw(w_dw1), "pw1": repack_pw(w_pw1), "g1": g1, "b1": b1,
      "dw2": repack_dw(w_dw2), "pw2": repack_pw(w_pw2), "g2": g2, "b2": b2,
  }
  torch_params = {
      "dw1": w_dw1, "pw1": w_pw1, "g1": g1, "b1": b1,
      "dw2": w_dw2, "pw2": w_pw2, "g2": g2, "b2": b2,
  }

  out = jax.block_until_ready(dws_conv_bn_relu_block(x, params))
  ref = jax.block_until_ready(_ref_block(x, torch_params))

  assert out.shape == (N, Cout, H, W), out.shape
  assert jnp.allclose(out, ref, rtol=2e-3, atol=2e-3), float(jnp.max(jnp.abs(out - ref)))

  print("KERNEL_OK")
</pallas_src>

<mosaic_0001>
module attributes {stable_mosaic.version = 11 : i64} {
  func.func @_fused_block_kernel(%arg0: i32, %arg1: memref<2x4x256xf32, #tpu.memory_space<vmem>>, %arg2: memref<4x1x256xf32, #tpu.memory_space<vmem>>, %arg3: memref<34x8x1xf32, #tpu.memory_space<vmem>>, %arg4: memref<2x8x256xf32, #tpu.memory_space<vmem>>) attributes {dimension_semantics = [#tpu.dimension_semantics<arbitrary>], iteration_bounds = array<i64: 1>, scalar_prefetch = 0 : i64, scratch_operands = 0 : i64, tpu.core_type = #tpu.core_type<tc>, window_params = [{pipeline_mode = #tpu.pipeline_mode<synchronous>, transform_indices = @transform_0, window_bounds = array<i64: 2, 4, 256>}, {pipeline_mode = #tpu.pipeline_mode<synchronous>, transform_indices = @transform_1, window_bounds = array<i64: 4, 1, 256>}, {pipeline_mode = #tpu.pipeline_mode<synchronous>, transform_indices = @transform_2, window_bounds = array<i64: 34, 8, 1>}, {pipeline_mode = #tpu.pipeline_mode<synchronous>, transform_indices = @transform_3, window_bounds = array<i64: 2, 8, 256>}]} {
    %c0 = arith.constant 0 : index
    %c0_0 = arith.constant 0 : index
    %c0_1 = arith.constant 0 : index
    %0 = vector.load %arg2[%c0, %c0_0, %c0_1] : memref<4x1x256xf32, #tpu.memory_space<vmem>>, vector<1x1x256xf32>
    %1 = vector.shape_cast %0 : vector<1x1x256xf32> to vector<1x256xf32>
    %c1 = arith.constant 1 : index
    %c0_2 = arith.constant 0 : index
    %c0_3 = arith.constant 0 : index
    %2 = vector.load %arg2[%c1, %c0_2, %c0_3] : memref<4x1x256xf32, #tpu.memory_space<vmem>>, vector<1x1x256xf32>
    %3 = vector.shape_cast %2 : vector<1x1x256xf32> to vector<1x256xf32>
    %c2 = arith.constant 2 : index
    %c0_4 = arith.constant 0 : index
    %c0_5 = arith.constant 0 : index
    %4 = vector.load %arg2[%c2, %c0_4, %c0_5] : memref<4x1x256xf32, #tpu.memory_space<vmem>>, vector<1x1x256xf32>
    %5 = vector.shape_cast %4 : vector<1x1x256xf32> to vector<1x256xf32>
    %c3 = arith.constant 3 : index
    %c0_6 = arith.constant 0 : index
    %c0_7 = arith.constant 0 : index
    %6 = vector.load %arg2[%c3, %c0_6, %c0_7] : memref<4x1x256xf32, #tpu.memory_space<vmem>>, vector<1x1x256xf32>
    %7 = vector.shape_cast %6 : vector<1x1x256xf32> to vector<1x256xf32>
    %c0_8 = arith.constant 0 : index
    %c0_9 = arith.constant 0 : index
    %c0_10 = arith.constant 0 : index
    %8 = vector.load %arg1[%c0_8, %c0_9, %c0_10] : memref<2x4x256xf32, #tpu.memory_space<vmem>>, vector<1x4x256xf32>
    %9 = vector.shape_cast %8 : vector<1x4x256xf32> to vector<4x256xf32>
    %c1_11 = arith.constant 1 : index
    %c0_12 = arith.constant 0 : index
    %c0_13 = arith.constant 0 : index
    %10 = vector.load %arg1[%c1_11, %c0_12, %c0_13] : memref<2x4x256xf32, #tpu.memory_space<vmem>>, vector<1x4x256xf32>
    %11 = vector.shape_cast %10 : vector<1x4x256xf32> to vector<4x256xf32>
    %c0_14 = arith.constant 0 : index
    %c0_15 = arith.constant 0 : index
    %c0_16 = arith.constant 0 : index
    %12 = vector.load %arg3[%c0_14, %c0_15, %c0_16] : memref<34x8x1xf32, #tpu.memory_space<vmem>>, vector<1x4x1xf32>
    %13 = vector.shape_cast %12 : vector<1x4x1xf32> to vector<4x1xf32>
    %c1_17 = arith.constant 1 : index
    %c0_18 = arith.constant 0 : index
    %c0_19 = arith.constant 0 : index
    %14 = vector.load %arg3[%c1_17, %c0_18, %c0_19] : memref<34x8x1xf32, #tpu.memory_space<vmem>>, vector<1x4x1xf32>
    %15 = vector.shape_cast %14 : vector<1x4x1xf32> to vector<4x1xf32>
    %c2_20 = arith.constant 2 : index
    %c0_21 = arith.constant 0 : index
    %c0_22 = arith.constant 0 : index
    %16 = vector.load %arg3[%c2_20, %c0_21, %c0_22] : memref<34x8x1xf32, #tpu.memory_space<vmem>>, vector<1x4x1xf32>
    %17 = vector.shape_cast %16 : vector<1x4x1xf32> to vector<4x1xf32>
    %c3_23 = arith.constant 3 : index
    %c0_24 = arith.constant 0 : index
    %c0_25 = arith.constant 0 : index
    %18 = vector.load %arg3[%c3_23, %c0_24, %c0_25] : memref<34x8x1xf32, #tpu.memory_space<vmem>>, vector<1x4x1xf32>
    %19 = vector.shape_cast %18 : vector<1x4x1xf32> to vector<4x1xf32>
    %c4 = arith.constant 4 : index
    %c0_26 = arith.constant 0 : index
    %c0_27 = arith.constant 0 : index
    %20 = vector.load %arg3[%c4, %c0_26, %c0_27] : memref<34x8x1xf32, #tpu.memory_space<vmem>>, vector<1x4x1xf32>
    %21 = vector.shape_cast %20 : vector<1x4x1xf32> to vector<4x1xf32>
    %c5 = arith.constant 5 : index
    %c0_28 = arith.constant 0 : index
    %c0_29 = arith.constant 0 : index
    %22 = vector.load %arg3[%c5, %c0_28, %c0_29] : memref<34x8x1xf32, #tpu.memory_space<vmem>>, vector<1x4x1xf32>
    %23 = vector.shape_cast %22 : vector<1x4x1xf32> to vector<4x1xf32>
    %c6 = arith.constant 6 : index
    %c0_30 = arith.constant 0 : index
    %c0_31 = arith.constant 0 : index
    %24 = vector.load %arg3[%c6, %c0_30, %c0_31] : memref<34x8x1xf32, #tpu.memory_space<vmem>>, vector<1x4x1xf32>
    %25 = vector.shape_cast %24 : vector<1x4x1xf32> to vector<4x1xf32>
    %c7 = arith.constant 7 : index
    %c0_32 = arith.constant 0 : index
    %c0_33 = arith.constant 0 : index
    %26 = vector.load %arg3[%c7, %c0_32, %c0_33] : memref<34x8x1xf32, #tpu.memory_space<vmem>>, vector<1x4x1xf32>
    %27 = vector.shape_cast %26 : vector<1x4x1xf32> to vector<4x1xf32>
    %c8 = arith.constant 8 : index
    %c0_34 = arith.constant 0 : index
    %c0_35 = arith.constant 0 : index
    %28 = vector.load %arg3[%c8, %c0_34, %c0_35] : memref<34x8x1xf32, #tpu.memory_space<vmem>>, vector<1x4x1xf32>
    %29 = vector.shape_cast %28 : vector<1x4x1xf32> to vector<4x1xf32>
    %c9 = arith.constant 9 : index
    %c0_36 = arith.constant 0 : index
    %c0_37 = arith.constant 0 : index
    %30 = vector.load %arg3[%c9, %c0_36, %c0_37] : memref<34x8x1xf32, #tpu.memory_space<vmem>>, vector<1x8x1xf32>
    %31 = vector.shape_cast %30 : vector<1x8x1xf32> to vector<8x1xf32>
    %c10 = arith.constant 10 : index
    %c0_38 = arith.constant 0 : index
    %c0_39 = arith.constant 0 : index
    %32 = vector.load %arg3[%c10, %c0_38, %c0_39] : memref<34x8x1xf32, #tpu.memory_space<vmem>>, vector<1x8x1xf32>
    %33 = vector.shape_cast %32 : vector<1x8x1xf32> to vector<8x1xf32>
    %c11 = arith.constant 11 : index
    %c0_40 = arith.constant 0 : index
    %c0_41 = arith.constant 0 : index
    %34 = vector.load %arg3[%c11, %c0_40, %c0_41] : memref<34x8x1xf32, #tpu.memory_space<vmem>>, vector<1x8x1xf32>
    %35 = vector.shape_cast %34 : vector<1x8x1xf32> to vector<8x1xf32>
    %c12 = arith.constant 12 : index
    %c0_42 = arith.constant 0 : index
    %c0_43 = arith.constant 0 : index
    %36 = vector.load %arg3[%c12, %c0_42, %c0_43] : memref<34x8x1xf32, #tpu.memory_space<vmem>>, vector<1x8x1xf32>
    %37 = vector.shape_cast %36 : vector<1x8x1xf32> to vector<8x1xf32>
    %c30 = arith.constant 30 : index
    %c0_44 = arith.constant 0 : index
    %c0_45 = arith.constant 0 : index
    %38 = vector.load %arg3[%c30, %c0_44, %c0_45] : memref<34x8x1xf32, #tpu.memory_space<vmem>>, vector<1x8x1xf32>
    %39 = vector.shape_cast %38 : vector<1x8x1xf32> to vector<8x1xf32>
    %c31 = arith.constant 31 : index
    %c0_46 = arith.constant 0 : index
    %c0_47 = arith.constant 0 : index
    %40 = vector.load %arg3[%c31, %c0_46, %c0_47] : memref<34x8x1xf32, #tpu.memory_space<vmem>>, vector<1x8x1xf32>
    %41 = vector.shape_cast %40 : vector<1x8x1xf32> to vector<8x1xf32>
    %42 = vector.broadcast %3 : vector<1x256xf32> to vector<4x256xf32>
    %43 = arith.mulf %9, %42 : vector<4x256xf32>
    %44 = vector.broadcast %1 : vector<1x256xf32> to vector<4x256xf32>
    %45 = arith.mulf %9, %44 : vector<4x256xf32>
    %c17_i32 = arith.constant 17 : i32
    %46 = tpu.dynamic_rotate %43 by %c17_i32 dim 1 : vector<4x256xf32>, i32 -> vector<4x256xf32>
    %47 = vector.broadcast %13 : vector<4x1xf32> to vector<4x256xf32>
    %48 = arith.mulf %46, %47 : vector<4x256xf32>
    %c16_i32 = arith.constant 16 : i32
    %49 = tpu.dynamic_rotate %9 by %c16_i32 dim 1 : vector<4x256xf32>, i32 -> vector<4x256xf32>
    %50 = vector.broadcast %15 : vector<4x1xf32> to vector<4x256xf32>
    %51 = arith.mulf %49, %50 : vector<4x256xf32>
    %52 = arith.addf %48, %51 : vector<4x256xf32>
    %c15_i32 = arith.constant 15 : i32
    %53 = tpu.dynamic_rotate %45 by %c15_i32 dim 1 : vector<4x256xf32>, i32 -> vector<4x256xf32>
    %54 = vector.broadcast %17 : vector<4x1xf32> to vector<4x256xf32>
    %55 = arith.mulf %53, %54 : vector<4x256xf32>
    %56 = arith.addf %52, %55 : vector<4x256xf32>
    %57 = vector.broadcast %5 : vector<1x256xf32> to vector<4x256xf32>
    %58 = arith.mulf %56, %57 : vector<4x256xf32>
    %c1_i32 = arith.constant 1 : i32
    %59 = tpu.dynamic_rotate %43 by %c1_i32 dim 1 : vector<4x256xf32>, i32 -> vector<4x256xf32>
    %60 = vector.broadcast %19 : vector<4x1xf32> to vector<4x256xf32>
    %61 = arith.mulf %59, %60 : vector<4x256xf32>
    %62 = vector.broadcast %21 : vector<4x1xf32> to vector<4x256xf32>
    %63 = arith.mulf %9, %62 : vector<4x256xf32>
    %64 = arith.addf %61, %63 : vector<4x256xf32>
    %c255_i32 = arith.constant 255 : i32
    %65 = tpu.dynamic_rotate %45 by %c255_i32 dim 1 : vector<4x256xf32>, i32 -> vector<4x256xf32>
    %66 = vector.broadcast %23 : vector<4x1xf32> to vector<4x256xf32>
    %67 = arith.mulf %65, %66 : vector<4x256xf32>
    %68 = arith.addf %64, %67 : vector<4x256xf32>
    %69 = arith.addf %58, %68 : vector<4x256xf32>
    %c241_i32 = arith.constant 241 : i32
    %70 = tpu.dynamic_rotate %43 by %c241_i32 dim 1 : vector<4x256xf32>, i32 -> vector<4x256xf32>
    %71 = vector.broadcast %25 : vector<4x1xf32> to vector<4x256xf32>
    %72 = arith.mulf %70, %71 : vector<4x256xf32>
    %c240_i32 = arith.constant 240 : i32
    %73 = tpu.dynamic_rotate %9 by %c240_i32 dim 1 : vector<4x256xf32>, i32 -> vector<4x256xf32>
    %74 = vector.broadcast %27 : vector<4x1xf32> to vector<4x256xf32>
    %75 = arith.mulf %73, %74 : vector<4x256xf32>
    %76 = arith.addf %72, %75 : vector<4x256xf32>
    %c239_i32 = arith.constant 239 : i32
    %77 = tpu.dynamic_rotate %45 by %c239_i32 dim 1 : vector<4x256xf32>, i32 -> vector<4x256xf32>
    %78 = vector.broadcast %29 : vector<4x1xf32> to vector<4x256xf32>
    %79 = arith.mulf %77, %78 : vector<4x256xf32>
    %80 = arith.addf %76, %79 : vector<4x256xf32>
    %81 = vector.broadcast %7 : vector<1x256xf32> to vector<4x256xf32>
    %82 = arith.mulf %80, %81 : vector<4x256xf32>
    %83 = arith.addf %69, %82 : vector<4x256xf32>
    %84 = vector.extract_strided_slice %83 {offsets = [0, 0], sizes = [1, 256], strides = [1, 1]} : vector<4x256xf32> to vector<1x256xf32>
    %85 = vector.broadcast %84 : vector<1x256xf32> to vector<8x256xf32>
    %86 = vector.broadcast %31 : vector<8x1xf32> to vector<8x256xf32>
    %87 = arith.mulf %85, %86 : vector<8x256xf32>
    %88 = vector.extract_strided_slice %83 {offsets = [1, 0], sizes = [1, 256], strides = [1, 1]} : vector<4x256xf32> to vector<1x256xf32>
    %89 = vector.broadcast %88 : vector<1x256xf32> to vector<8x256xf32>
    %90 = vector.broadcast %33 : vector<8x1xf32> to vector<8x256xf32>
    %91 = arith.mulf %89, %90 : vector<8x256xf32>
    %92 = arith.addf %87, %91 : vector<8x256xf32>
    %93 = vector.extract_strided_slice %83 {offsets = [2, 0], sizes = [1, 256], strides = [1, 1]} : vector<4x256xf32> to vector<1x256xf32>
    %94 = vector.broadcast %93 : vector<1x256xf32> to vector<8x256xf32>
    %95 = vector.broadcast %35 : vector<8x1xf32> to vector<8x256xf32>
    %96 = arith.mulf %94, %95 : vector<8x256xf32>
    %97 = arith.addf %92, %96 : vector<8x256xf32>
    %98 = vector.extract_strided_slice %83 {offsets = [3, 0], sizes = [1, 256], strides = [1, 1]} : vector<4x256xf32> to vector<1x256xf32>
    %99 = vector.broadcast %98 : vector<1x256xf32> to vector<8x256xf32>
    %100 = vector.broadcast %37 : vector<8x1xf32> to vector<8x256xf32>
    %101 = arith.mulf %99, %100 : vector<8x256xf32>
    %102 = arith.addf %97, %101 : vector<8x256xf32>
    %cst = arith.constant dense<0.000000e+00> : vector<8xf32>
    %103 = vector.multi_reduction <add>, %102, %cst [1] : vector<8x256xf32> to vector<8xf32>
    %104 = vector.shape_cast %103 : vector<8xf32> to vector<8x1xf32>
    %105 = arith.mulf %102, %102 : vector<8x256xf32>
    %cst_48 = arith.constant dense<0.000000e+00> : vector<8xf32>
    %106 = vector.multi_reduction <add>, %105, %cst_48 [1] : vector<8x256xf32> to vector<8xf32>
    %107 = vector.shape_cast %106 : vector<8xf32> to vector<8x1xf32>
    %108 = vector.broadcast %3 : vector<1x256xf32> to vector<4x256xf32>
    %109 = arith.mulf %11, %108 : vector<4x256xf32>
    %110 = vector.broadcast %1 : vector<1x256xf32> to vector<4x256xf32>
    %111 = arith.mulf %11, %110 : vector<4x256xf32>
    %c17_i32_49 = arith.constant 17 : i32
    %112 = tpu.dynamic_rotate %109 by %c17_i32_49 dim 1 : vector<4x256xf32>, i32 -> vector<4x256xf32>
    %113 = vector.broadcast %13 : vector<4x1xf32> to vector<4x256xf32>
    %114 = arith.mulf %112, %113 : vector<4x256xf32>
    %c16_i32_50 = arith.constant 16 : i32
    %115 = tpu.dynamic_rotate %11 by %c16_i32_50 dim 1 : vector<4x256xf32>, i32 -> vector<4x256xf32>
    %116 = vector.broadcast %15 : vector<4x1xf32> to vector<4x256xf32>
    %117 = arith.mulf %115, %116 : vector<4x256xf32>
    %118 = arith.addf %114, %117 : vector<4x256xf32>
    %c15_i32_51 = arith.constant 15 : i32
    %119 = tpu.dynamic_rotate %111 by %c15_i32_51 dim 1 : vector<4x256xf32>, i32 -> vector<4x256xf32>
    %120 = vector.broadcast %17 : vector<4x1xf32> to vector<4x256xf32>
    %121 = arith.mulf %119, %120 : vector<4x256xf32>
    %122 = arith.addf %118, %121 : vector<4x256xf32>
    %123 = vector.broadcast %5 : vector<1x256xf32> to vector<4x256xf32>
    %124 = arith.mulf %122, %123 : vector<4x256xf32>
    %c1_i32_52 = arith.constant 1 : i32
    %125 = tpu.dynamic_rotate %109 by %c1_i32_52 dim 1 : vector<4x256xf32>, i32 -> vector<4x256xf32>
    %126 = vector.broadcast %19 : vector<4x1xf32> to vector<4x256xf32>
    %127 = arith.mulf %125, %126 : vector<4x256xf32>
    %128 = vector.broadcast %21 : vector<4x1xf32> to vector<4x256xf32>
    %129 = arith.mulf %11, %128 : vector<4x256xf32>
    %130 = arith.addf %127, %129 : vector<4x256xf32>
    %c255_i32_53 = arith.constant 255 : i32
    %131 = tpu.dynamic_rotate %111 by %c255_i32_53 dim 1 : vector<4x256xf32>, i32 -> vector<4x256xf32>
    %132 = vector.broadcast %23 : vector<4x1xf32> to vector<4x256xf32>
    %133 = arith.mulf %131, %132 : vector<4x256xf32>
    %134 = arith.addf %130, %133 : vector<4x256xf32>
    %135 = arith.addf %124, %134 : vector<4x256xf32>
    %c241_i32_54 = arith.constant 241 : i32
    %136 = tpu.dynamic_rotate %109 by %c241_i32_54 dim 1 : vector<4x256xf32>, i32 -> vector<4x256xf32>
    %137 = vector.broadcast %25 : vector<4x1xf32> to vector<4x256xf32>
    %138 = arith.mulf %136, %137 : vector<4x256xf32>
    %c240_i32_55 = arith.constant 240 : i32
    %139 = tpu.dynamic_rotate %11 by %c240_i32_55 dim 1 : vector<4x256xf32>, i32 -> vector<4x256xf32>
    %140 = vector.broadcast %27 : vector<4x1xf32> to vector<4x256xf32>
    %141 = arith.mulf %139, %140 : vector<4x256xf32>
    %142 = arith.addf %138, %141 : vector<4x256xf32>
    %c239_i32_56 = arith.constant 239 : i32
    %143 = tpu.dynamic_rotate %111 by %c239_i32_56 dim 1 : vector<4x256xf32>, i32 -> vector<4x256xf32>
    %144 = vector.broadcast %29 : vector<4x1xf32> to vector<4x256xf32>
    %145 = arith.mulf %143, %144 : vector<4x256xf32>
    %146 = arith.addf %142, %145 : vector<4x256xf32>
    %147 = vector.broadcast %7 : vector<1x256xf32> to vector<4x256xf32>
    %148 = arith.mulf %146, %147 : vector<4x256xf32>
    %149 = arith.addf %135, %148 : vector<4x256xf32>
    %150 = vector.extract_strided_slice %149 {offsets = [0, 0], sizes = [1, 256], strides = [1, 1]} : vector<4x256xf32> to vector<1x256xf32>
    %151 = vector.broadcast %150 : vector<1x256xf32> to vector<8x256xf32>
    %152 = vector.broadcast %31 : vector<8x1xf32> to vector<8x256xf32>
    %153 = arith.mulf %151, %152 : vector<8x256xf32>
    %154 = vector.extract_strided_slice %149 {offsets = [1, 0], sizes = [1, 256], strides = [1, 1]} : vector<4x256xf32> to vector<1x256xf32>
    %155 = vector.broadcast %154 : vector<1x256xf32> to vector<8x256xf32>
    %156 = vector.broadcast %33 : vector<8x1xf32> to vector<8x256xf32>
    %157 = arith.mulf %155, %156 : vector<8x256xf32>
    %158 = arith.addf %153, %157 : vector<8x256xf32>
    %159 = vector.extract_strided_slice %149 {offsets = [2, 0], sizes = [1, 256], strides = [1, 1]} : vector<4x256xf32> to vector<1x256xf32>
    %160 = vector.broadcast %159 : vector<1x256xf32> to vector<8x256xf32>
    %161 = vector.broadcast %35 : vector<8x1xf32> to vector<8x256xf32>
    %162 = arith.mulf %160, %161 : vector<8x256xf32>
    %163 = arith.addf %158, %162 : vector<8x256xf32>
    %164 = vector.extract_strided_slice %149 {offsets = [3, 0], sizes = [1, 256], strides = [1, 1]} : vector<4x256xf32> to vector<1x256xf32>
    %165 = vector.broadcast %164 : vector<1x256xf32> to vector<8x256xf32>
    %166 = vector.broadcast %37 : vector<8x1xf32> to vector<8x256xf32>
    %167 = arith.mulf %165, %166 : vector<8x256xf32>
    %168 = arith.addf %163, %167 : vector<8x256xf32>
    %cst_57 = arith.constant dense<0.000000e+00> : vector<8xf32>
    %169 = vector.multi_reduction <add>, %168, %cst_57 [1] : vector<8x256xf32> to vector<8xf32>
    %170 = vector.shape_cast %169 : vector<8xf32> to vector<8x1xf32>
    %171 = arith.mulf %168, %168 : vector<8x256xf32>
    %cst_58 = arith.constant dense<0.000000e+00> : vector<8xf32>
    %172 = vector.multi_reduction <add>, %171, %cst_58 [1] : vector<8x256xf32> to vector<8xf32>
    %173 = vector.shape_cast %172 : vector<8xf32> to vector<8x1xf32>
    %174 = arith.addf %104, %170 : vector<8x1xf32>
    %175 = arith.addf %107, %173 : vector<8x1xf32>
    %cst_59 = arith.constant 0.001953125 : f32
    %176 = vector.broadcast %cst_59 : f32 to vector<8x1xf32>
    %177 = arith.mulf %174, %176 : vector<8x1xf32>
    %cst_60 = arith.constant 0.001953125 : f32
    %178 = vector.broadcast %cst_60 : f32 to vector<8x1xf32>
    %179 = arith.mulf %175, %178 : vector<8x1xf32>
    %180 = arith.mulf %177, %177 : vector<8x1xf32>
    %181 = arith.subf %179, %180 : vector<8x1xf32>
    %cst_61 = arith.constant 9.99999974E-6 : f32
    %182 = vector.broadcast %cst_61 : f32 to vector<8x1xf32>
    %183 = arith.addf %181, %182 : vector<8x1xf32>
    %184 = math.rsqrt %183 : vector<8x1xf32>
    %185 = arith.mulf %39, %184 : vector<8x1xf32>
    %186 = arith.mulf %177, %185 : vector<8x1xf32>
    %187 = arith.subf %41, %186 : vector<8x1xf32>
    %188 = vector.broadcast %185 : vector<8x1xf32> to vector<8x256xf32>
    %189 = arith.mulf %102, %188 : vector<8x256xf32>
    %190 = vector.broadcast %187 : vector<8x1xf32> to vector<8x256xf32>
    %191 = arith.addf %189, %190 : vector<8x256xf32>
    %cst_62 = arith.constant 0.000000e+00 : f32
    %192 = vector.broadcast %cst_62 : f32 to vector<8x256xf32>
    %193 = arith.maximumf %191, %192 : vector<8x256xf32>
    %194 = vector.broadcast %185 : vector<8x1xf32> to vector<8x256xf32>
    %195 = arith.mulf %168, %194 : vector<8x256xf32>
    %196 = vector.broadcast %187 : vector<8x1xf32> to vector<8x256xf32>
    %197 = arith.addf %195, %196 : vector<8x256xf32>
    %cst_63 = arith.constant 0.000000e+00 : f32
    %198 = vector.broadcast %cst_63 : f32 to vector<8x256xf32>
    %199 = arith.maximumf %197, %198 : vector<8x256xf32>
    %c13 = arith.constant 13 : index
    %c0_64 = arith.constant 0 : index
    %c0_65 = arith.constant 0 : index
    %200 = vector.load %arg3[%c13, %c0_64, %c0_65] : memref<34x8x1xf32, #tpu.memory_space<vmem>>, vector<1x8x1xf32>
    %201 = vector.shape_cast %200 : vector<1x8x1xf32> to vector<8x1xf32>
    %c14 = arith.constant 14 : index
    %c0_66 = arith.constant 0 : index
    %c0_67 = arith.constant 0 : index
    %202 = vector.load %arg3[%c14, %c0_66, %c0_67] : memref<34x8x1xf32, #tpu.memory_space<vmem>>, vector<1x8x1xf32>
    %203 = vector.shape_cast %202 : vector<1x8x1xf32> to vector<8x1xf32>
    %c15 = arith.constant 15 : index
    %c0_68 = arith.constant 0 : index
    %c0_69 = arith.constant 0 : index
    %204 = vector.load %arg3[%c15, %c0_68, %c0_69] : memref<34x8x1xf32, #tpu.memory_space<vmem>>, vector<1x8x1xf32>
    %205 = vector.shape_cast %204 : vector<1x8x1xf32> to vector<8x1xf32>
    %c16 = arith.constant 16 : index
    %c0_70 = arith.constant 0 : index
    %c0_71 = arith.constant 0 : index
    %206 = vector.load %arg3[%c16, %c0_70, %c0_71] : memref<34x8x1xf32, #tpu.memory_space<vmem>>, vector<1x8x1xf32>
    %207 = vector.shape_cast %206 : vector<1x8x1xf32> to vector<8x1xf32>
    %c17 = arith.constant 17 : index
    %c0_72 = arith.constant 0 : index
    %c0_73 = arith.constant 0 : index
    %208 = vector.load %arg3[%c17, %c0_72, %c0_73] : memref<34x8x1xf32, #tpu.memory_space<vmem>>, vector<1x8x1xf32>
    %209 = vector.shape_cast %208 : vector<1x8x1xf32> to vector<8x1xf32>
    %c18 = arith.constant 18 : index
    %c0_74 = arith.constant 0 : index
    %c0_75 = arith.constant 0 : index
    %210 = vector.load %arg3[%c18, %c0_74, %c0_75] : memref<34x8x1xf32, #tpu.memory_space<vmem>>, vector<1x8x1xf32>
    %211 = vector.shape_cast %210 : vector<1x8x1xf32> to vector<8x1xf32>
    %c19 = arith.constant 19 : index
    %c0_76 = arith.constant 0 : index
    %c0_77 = arith.constant 0 : index
    %212 = vector.load %arg3[%c19, %c0_76, %c0_77] : memref<34x8x1xf32, #tpu.memory_space<vmem>>, vector<1x8x1xf32>
    %213 = vector.shape_cast %212 : vector<1x8x1xf32> to vector<8x1xf32>
    %c20 = arith.constant 20 : index
    %c0_78 = arith.constant 0 : index
    %c0_79 = arith.constant 0 : index
    %214 = vector.load %arg3[%c20, %c0_78, %c0_79] : memref<34x8x1xf32, #tpu.memory_space<vmem>>, vector<1x8x1xf32>
    %215 = vector.shape_cast %214 : vector<1x8x1xf32> to vector<8x1xf32>
    %c21 = arith.constant 21 : index
    %c0_80 = arith.constant 0 : index
    %c0_81 = arith.constant 0 : index
    %216 = vector.load %arg3[%c21, %c0_80, %c0_81] : memref<34x8x1xf32, #tpu.memory_space<vmem>>, vector<1x8x1xf32>
    %217 = vector.shape_cast %216 : vector<1x8x1xf32> to vector<8x1xf32>
    %c22 = arith.constant 22 : index
    %c0_82 = arith.constant 0 : index
    %c0_83 = arith.constant 0 : index
    %218 = vector.load %arg3[%c22, %c0_82, %c0_83] : memref<34x8x1xf32, #tpu.memory_space<vmem>>, vector<1x8x1xf32>
    %219 = vector.shape_cast %218 : vector<1x8x1xf32> to vector<8x1xf32>
    %c23 = arith.constant 23 : index
    %c0_84 = arith.constant 0 : index
    %c0_85 = arith.constant 0 : index
    %220 = vector.load %arg3[%c23, %c0_84, %c0_85] : memref<34x8x1xf32, #tpu.memory_space<vmem>>, vector<1x8x1xf32>
    %221 = vector.shape_cast %220 : vector<1x8x1xf32> to vector<8x1xf32>
    %c24 = arith.constant 24 : index
    %c0_86 = arith.constant 0 : index
    %c0_87 = arith.constant 0 : index
    %222 = vector.load %arg3[%c24, %c0_86, %c0_87] : memref<34x8x1xf32, #tpu.memory_space<vmem>>, vector<1x8x1xf32>
    %223 = vector.shape_cast %222 : vector<1x8x1xf32> to vector<8x1xf32>
    %c25 = arith.constant 25 : index
    %c0_88 = arith.constant 0 : index
    %c0_89 = arith.constant 0 : index
    %224 = vector.load %arg3[%c25, %c0_88, %c0_89] : memref<34x8x1xf32, #tpu.memory_space<vmem>>, vector<1x8x1xf32>
    %225 = vector.shape_cast %224 : vector<1x8x1xf32> to vector<8x1xf32>
    %c26 = arith.constant 26 : index
    %c0_90 = arith.constant 0 : index
    %c0_91 = arith.constant 0 : index
    %226 = vector.load %arg3[%c26, %c0_90, %c0_91] : memref<34x8x1xf32, #tpu.memory_space<vmem>>, vector<1x8x1xf32>
    %227 = vector.shape_cast %226 : vector<1x8x1xf32> to vector<8x1xf32>
    %c27 = arith.constant 27 : index
    %c0_92 = arith.constant 0 : index
    %c0_93 = arith.constant 0 : index
    %228 = vector.load %arg3[%c27, %c0_92, %c0_93] : memref<34x8x1xf32, #tpu.memory_space<vmem>>, vector<1x8x1xf32>
    %229 = vector.shape_cast %228 : vector<1x8x1xf32> to vector<8x1xf32>
    %c28 = arith.constant 28 : index
    %c0_94 = arith.constant 0 : index
    %c0_95 = arith.constant 0 : index
    %230 = vector.load %arg3[%c28, %c0_94, %c0_95] : memref<34x8x1xf32, #tpu.memory_space<vmem>>, vector<1x8x1xf32>
    %231 = vector.shape_cast %230 : vector<1x8x1xf32> to vector<8x1xf32>
    %c29 = arith.constant 29 : index
    %c0_96 = arith.constant 0 : index
    %c0_97 = arith.constant 0 : index
    %232 = vector.load %arg3[%c29, %c0_96, %c0_97] : memref<34x8x1xf32, #tpu.memory_space<vmem>>, vector<1x8x1xf32>
    %233 = vector.shape_cast %232 : vector<1x8x1xf32> to vector<8x1xf32>
    %c32 = arith.constant 32 : index
    %c0_98 = arith.constant 0 : index
    %c0_99 = arith.constant 0 : index
    %234 = vector.load %arg3[%c32, %c0_98, %c0_99] : memref<34x8x1xf32, #tpu.memory_space<vmem>>, vector<1x8x1xf32>
    %235 = vector.shape_cast %234 : vector<1x8x1xf32> to vector<8x1xf32>
    %c33 = arith.constant 33 : index
    %c0_100 = arith.constant 0 : index
    %c0_101 = arith.constant 0 : index
    %236 = vector.load %arg3[%c33, %c0_100, %c0_101] : memref<34x8x1xf32, #tpu.memory_space<vmem>>, vector<1x8x1xf32>
    %237 = vector.shape_cast %236 : vector<1x8x1xf32> to vector<8x1xf32>
    %238 = vector.broadcast %3 : vector<1x256xf32> to vector<8x256xf32>
    %239 = arith.mulf %193, %238 : vector<8x256xf32>
    %240 = vector.broadcast %1 : vector<1x256xf32> to vector<8x256xf32>
    %241 = arith.mulf %193, %240 : vector<8x256xf32>
    %c17_i32_102 = arith.constant 17 : i32
    %242 = tpu.dynamic_rotate %239 by %c17_i32_102 dim 1 : vector<8x256xf32>, i32 -> vector<8x256xf32>
    %243 = vector.broadcast %201 : vector<8x1xf32> to vector<8x256xf32>
    %244 = arith.mulf %242, %243 : vector<8x256xf32>
    %c16_i32_103 = arith.constant 16 : i32
    %245 = tpu.dynamic_rotate %193 by %c16_i32_103 dim 1 : vector<8x256xf32>, i32 -> vector<8x256xf32>
    %246 = vector.broadcast %203 : vector<8x1xf32> to vector<8x256xf32>
    %247 = arith.mulf %245, %246 : vector<8x256xf32>
    %248 = arith.addf %244, %247 : vector<8x256xf32>
    %c15_i32_104 = arith.constant 15 : i32
    %249 = tpu.dynamic_rotate %241 by %c15_i32_104 dim 1 : vector<8x256xf32>, i32 -> vector<8x256xf32>
    %250 = vector.broadcast %205 : vector<8x1xf32> to vector<8x256xf32>
    %251 = arith.mulf %249, %250 : vector<8x256xf32>
    %252 = arith.addf %248, %251 : vector<8x256xf32>
    %253 = vector.broadcast %5 : vector<1x256xf32> to vector<8x256xf32>
    %254 = arith.mulf %252, %253 : vector<8x256xf32>
    %c1_i32_105 = arith.constant 1 : i32
    %255 = tpu.dynamic_rotate %239 by %c1_i32_105 dim 1 : vector<8x256xf32>, i32 -> vector<8x256xf32>
    %256 = vector.broadcast %207 : vector<8x1xf32> to vector<8x256xf32>
    %257 = arith.mulf %255, %256 : vector<8x256xf32>
    %258 = vector.broadcast %209 : vector<8x1xf32> to vector<8x256xf32>
    %259 = arith.mulf %193, %258 : vector<8x256xf32>
    %260 = arith.addf %257, %259 : vector<8x256xf32>
    %c255_i32_106 = arith.constant 255 : i32
    %261 = tpu.dynamic_rotate %241 by %c255_i32_106 dim 1 : vector<8x256xf32>, i32 -> vector<8x256xf32>
    %262 = vector.broadcast %211 : vector<8x1xf32> to vector<8x256xf32>
    %263 = arith.mulf %261, %262 : vector<8x256xf32>
    %264 = arith.addf %260, %263 : vector<8x256xf32>
    %265 = arith.addf %254, %264 : vector<8x256xf32>
    %c241_i32_107 = arith.constant 241 : i32
    %266 = tpu.dynamic_rotate %239 by %c241_i32_107 dim 1 : vector<8x256xf32>, i32 -> vector<8x256xf32>
    %267 = vector.broadcast %213 : vector<8x1xf32> to vector<8x256xf32>
    %268 = arith.mulf %266, %267 : vector<8x256xf32>
    %c240_i32_108 = arith.constant 240 : i32
    %269 = tpu.dynamic_rotate %193 by %c240_i32_108 dim 1 : vector<8x256xf32>, i32 -> vector<8x256xf32>
    %270 = vector.broadcast %215 : vector<8x1xf32> to vector<8x256xf32>
    %271 = arith.mulf %269, %270 : vector<8x256xf32>
    %272 = arith.addf %268, %271 : vector<8x256xf32>
    %c239_i32_109 = arith.constant 239 : i32
    %273 = tpu.dynamic_rotate %241 by %c239_i32_109 dim 1 : vector<8x256xf32>, i32 -> vector<8x256xf32>
    %274 = vector.broadcast %217 : vector<8x1xf32> to vector<8x256xf32>
    %275 = arith.mulf %273, %274 : vector<8x256xf32>
    %276 = arith.addf %272, %275 : vector<8x256xf32>
    %277 = vector.broadcast %7 : vector<1x256xf32> to vector<8x256xf32>
    %278 = arith.mulf %276, %277 : vector<8x256xf32>
    %279 = arith.addf %265, %278 : vector<8x256xf32>
    %280 = vector.extract_strided_slice %279 {offsets = [0, 0], sizes = [1, 256], strides = [1, 1]} : vector<8x256xf32> to vector<1x256xf32>
    %281 = vector.broadcast %280 : vector<1x256xf32> to vector<8x256xf32>
    %282 = vector.broadcast %219 : vector<8x1xf32> to vector<8x256xf32>
    %283 = arith.mulf %281, %282 : vector<8x256xf32>
    %284 = vector.extract_strided_slice %279 {offsets = [1, 0], sizes = [1, 256], strides = [1, 1]} : vector<8x256xf32> to vector<1x256xf32>
    %285 = vector.broadcast %284 : vector<1x256xf32> to vector<8x256xf32>
    %286 = vector.broadcast %221 : vector<8x1xf32> to vector<8x256xf32>
    %287 = arith.mulf %285, %286 : vector<8x256xf32>
    %288 = arith.addf %283, %287 : vector<8x256xf32>
    %289 = vector.extract_strided_slice %279 {offsets = [2, 0], sizes = [1, 256], strides = [1, 1]} : vector<8x256xf32> to vector<1x256xf32>
    %290 = vector.broadcast %289 : vector<1x256xf32> to vector<8x256xf32>
    %291 = vector.broadcast %223 : vector<8x1xf32> to vector<8x256xf32>
    %292 = arith.mulf %290, %291 : vector<8x256xf32>
    %293 = arith.addf %288, %292 : vector<8x256xf32>
    %294 = vector.extract_strided_slice %279 {offsets = [3, 0], sizes = [1, 256], strides = [1, 1]} : vector<8x256xf32> to vector<1x256xf32>
    %295 = vector.broadcast %294 : vector<1x256xf32> to vector<8x256xf32>
    %296 = vector.broadcast %225 : vector<8x1xf32> to vector<8x256xf32>
    %297 = arith.mulf %295, %296 : vector<8x256xf32>
    %298 = arith.addf %293, %297 : vector<8x256xf32>
    %299 = vector.extract_strided_slice %279 {offsets = [4, 0], sizes = [1, 256], strides = [1, 1]} : vector<8x256xf32> to vector<1x256xf32>
    %300 = vector.broadcast %299 : vector<1x256xf32> to vector<8x256xf32>
    %301 = vector.broadcast %227 : vector<8x1xf32> to vector<8x256xf32>
    %302 = arith.mulf %300, %301 : vector<8x256xf32>
    %303 = arith.addf %298, %302 : vector<8x256xf32>
    %304 = vector.extract_strided_slice %279 {offsets = [5, 0], sizes = [1, 256], strides = [1, 1]} : vector<8x256xf32> to vector<1x256xf32>
    %305 = vector.broadcast %304 : vector<1x256xf32> to vector<8x256xf32>
    %306 = vector.broadcast %229 : vector<8x1xf32> to vector<8x256xf32>
    %307 = arith.mulf %305, %306 : vector<8x256xf32>
    %308 = arith.addf %303, %307 : vector<8x256xf32>
    %309 = vector.extract_strided_slice %279 {offsets = [6, 0], sizes = [1, 256], strides = [1, 1]} : vector<8x256xf32> to vector<1x256xf32>
    %310 = vector.broadcast %309 : vector<1x256xf32> to vector<8x256xf32>
    %311 = vector.broadcast %231 : vector<8x1xf32> to vector<8x256xf32>
    %312 = arith.mulf %310, %311 : vector<8x256xf32>
    %313 = arith.addf %308, %312 : vector<8x256xf32>
    %314 = vector.extract_strided_slice %279 {offsets = [7, 0], sizes = [1, 256], strides = [1, 1]} : vector<8x256xf32> to vector<1x256xf32>
    %315 = vector.broadcast %314 : vector<1x256xf32> to vector<8x256xf32>
    %316 = vector.broadcast %233 : vector<8x1xf32> to vector<8x256xf32>
    %317 = arith.mulf %315, %316 : vector<8x256xf32>
    %318 = arith.addf %313, %317 : vector<8x256xf32>
    %cst_110 = arith.constant dense<0.000000e+00> : vector<8xf32>
    %319 = vector.multi_reduction <add>, %318, %cst_110 [1] : vector<8x256xf32> to vector<8xf32>
    %320 = vector.shape_cast %319 : vector<8xf32> to vector<8x1xf32>
    %321 = arith.mulf %318, %318 : vector<8x256xf32>
    %cst_111 = arith.constant dense<0.000000e+00> : vector<8xf32>
    %322 = vector.multi_reduction <add>, %321, %cst_111 [1] : vector<8x256xf32> to vector<8xf32>
    %323 = vector.shape_cast %322 : vector<8xf32> to vector<8x1xf32>
    %324 = vector.broadcast %3 : vector<1x256xf32> to vector<8x256xf32>
    %325 = arith.mulf %199, %324 : vector<8x256xf32>
    %326 = vector.broadcast %1 : vector<1x256xf32> to vector<8x256xf32>
    %327 = arith.mulf %199, %326 : vector<8x256xf32>
    %c17_i32_112 = arith.constant 17 : i32
    %328 = tpu.dynamic_rotate %325 by %c17_i32_112 dim 1 : vector<8x256xf32>, i32 -> vector<8x256xf32>
    %329 = vector.broadcast %201 : vector<8x1xf32> to vector<8x256xf32>
    %330 = arith.mulf %328, %329 : vector<8x256xf32>
    %c16_i32_113 = arith.constant 16 : i32
    %331 = tpu.dynamic_rotate %199 by %c16_i32_113 dim 1 : vector<8x256xf32>, i32 -> vector<8x256xf32>
    %332 = vector.broadcast %203 : vector<8x1xf32> to vector<8x256xf32>
    %333 = arith.mulf %331, %332 : vector<8x256xf32>
    %334 = arith.addf %330, %333 : vector<8x256xf32>
    %c15_i32_114 = arith.constant 15 : i32
    %335 = tpu.dynamic_rotate %327 by %c15_i32_114 dim 1 : vector<8x256xf32>, i32 -> vector<8x256xf32>
    %336 = vector.broadcast %205 : vector<8x1xf32> to vector<8x256xf32>
    %337 = arith.mulf %335, %336 : vector<8x256xf32>
    %338 = arith.addf %334, %337 : vector<8x256xf32>
    %339 = vector.broadcast %5 : vector<1x256xf32> to vector<8x256xf32>
    %340 = arith.mulf %338, %339 : vector<8x256xf32>
    %c1_i32_115 = arith.constant 1 : i32
    %341 = tpu.dynamic_rotate %325 by %c1_i32_115 dim 1 : vector<8x256xf32>, i32 -> vector<8x256xf32>
    %342 = vector.broadcast %207 : vector<8x1xf32> to vector<8x256xf32>
    %343 = arith.mulf %341, %342 : vector<8x256xf32>
    %344 = vector.broadcast %209 : vector<8x1xf32> to vector<8x256xf32>
    %345 = arith.mulf %199, %344 : vector<8x256xf32>
    %346 = arith.addf %343, %345 : vector<8x256xf32>
    %c255_i32_116 = arith.constant 255 : i32
    %347 = tpu.dynamic_rotate %327 by %c255_i32_116 dim 1 : vector<8x256xf32>, i32 -> vector<8x256xf32>
    %348 = vector.broadcast %211 : vector<8x1xf32> to vector<8x256xf32>
    %349 = arith.mulf %347, %348 : vector<8x256xf32>
    %350 = arith.addf %346, %349 : vector<8x256xf32>
    %351 = arith.addf %340, %350 : vector<8x256xf32>
    %c241_i32_117 = arith.constant 241 : i32
    %352 = tpu.dynamic_rotate %325 by %c241_i32_117 dim 1 : vector<8x256xf32>, i32 -> vector<8x256xf32>
    %353 = vector.broadcast %213 : vector<8x1xf32> to vector<8x256xf32>
    %354 = arith.mulf %352, %353 : vector<8x256xf32>
    %c240_i32_118 = arith.constant 240 : i32
    %355 = tpu.dynamic_rotate %199 by %c240_i32_118 dim 1 : vector<8x256xf32>, i32 -> vector<8x256xf32>
    %356 = vector.broadcast %215 : vector<8x1xf32> to vector<8x256xf32>
    %357 = arith.mulf %355, %356 : vector<8x256xf32>
    %358 = arith.addf %354, %357 : vector<8x256xf32>
    %c239_i32_119 = arith.constant 239 : i32
    %359 = tpu.dynamic_rotate %327 by %c239_i32_119 dim 1 : vector<8x256xf32>, i32 -> vector<8x256xf32>
    %360 = vector.broadcast %217 : vector<8x1xf32> to vector<8x256xf32>
    %361 = arith.mulf %359, %360 : vector<8x256xf32>
    %362 = arith.addf %358, %361 : vector<8x256xf32>
    %363 = vector.broadcast %7 : vector<1x256xf32> to vector<8x256xf32>
    %364 = arith.mulf %362, %363 : vector<8x256xf32>
    %365 = arith.addf %351, %364 : vector<8x256xf32>
    %366 = vector.extract_strided_slice %365 {offsets = [0, 0], sizes = [1, 256], strides = [1, 1]} : vector<8x256xf32> to vector<1x256xf32>
    %367 = vector.broadcast %366 : vector<1x256xf32> to vector<8x256xf32>
    %368 = vector.broadcast %219 : vector<8x1xf32> to vector<8x256xf32>
    %369 = arith.mulf %367, %368 : vector<8x256xf32>
    %370 = vector.extract_strided_slice %365 {offsets = [1, 0], sizes = [1, 256], strides = [1, 1]} : vector<8x256xf32> to vector<1x256xf32>
    %371 = vector.broadcast %370 : vector<1x256xf32> to vector<8x256xf32>
    %372 = vector.broadcast %221 : vector<8x1xf32> to vector<8x256xf32>
    %373 = arith.mulf %371, %372 : vector<8x256xf32>
    %374 = arith.addf %369, %373 : vector<8x256xf32>
    %375 = vector.extract_strided_slice %365 {offsets = [2, 0], sizes = [1, 256], strides = [1, 1]} : vector<8x256xf32> to vector<1x256xf32>
    %376 = vector.broadcast %375 : vector<1x256xf32> to vector<8x256xf32>
    %377 = vector.broadcast %223 : vector<8x1xf32> to vector<8x256xf32>
    %378 = arith.mulf %376, %377 : vector<8x256xf32>
    %379 = arith.addf %374, %378 : vector<8x256xf32>
    %380 = vector.extract_strided_slice %365 {offsets = [3, 0], sizes = [1, 256], strides = [1, 1]} : vector<8x256xf32> to vector<1x256xf32>
    %381 = vector.broadcast %380 : vector<1x256xf32> to vector<8x256xf32>
    %382 = vector.broadcast %225 : vector<8x1xf32> to vector<8x256xf32>
    %383 = arith.mulf %381, %382 : vector<8x256xf32>
    %384 = arith.addf %379, %383 : vector<8x256xf32>
    %385 = vector.extract_strided_slice %365 {offsets = [4, 0], sizes = [1, 256], strides = [1, 1]} : vector<8x256xf32> to vector<1x256xf32>
    %386 = vector.broadcast %385 : vector<1x256xf32> to vector<8x256xf32>
    %387 = vector.broadcast %227 : vector<8x1xf32> to vector<8x256xf32>
    %388 = arith.mulf %386, %387 : vector<8x256xf32>
    %389 = arith.addf %384, %388 : vector<8x256xf32>
    %390 = vector.extract_strided_slice %365 {offsets = [5, 0], sizes = [1, 256], strides = [1, 1]} : vector<8x256xf32> to vector<1x256xf32>
    %391 = vector.broadcast %390 : vector<1x256xf32> to vector<8x256xf32>
    %392 = vector.broadcast %229 : vector<8x1xf32> to vector<8x256xf32>
    %393 = arith.mulf %391, %392 : vector<8x256xf32>
    %394 = arith.addf %389, %393 : vector<8x256xf32>
    %395 = vector.extract_strided_slice %365 {offsets = [6, 0], sizes = [1, 256], strides = [1, 1]} : vector<8x256xf32> to vector<1x256xf32>
    %396 = vector.broadcast %395 : vector<1x256xf32> to vector<8x256xf32>
    %397 = vector.broadcast %231 : vector<8x1xf32> to vector<8x256xf32>
    %398 = arith.mulf %396, %397 : vector<8x256xf32>
    %399 = arith.addf %394, %398 : vector<8x256xf32>
    %400 = vector.extract_strided_slice %365 {offsets = [7, 0], sizes = [1, 256], strides = [1, 1]} : vector<8x256xf32> to vector<1x256xf32>
    %401 = vector.broadcast %400 : vector<1x256xf32> to vector<8x256xf32>
    %402 = vector.broadcast %233 : vector<8x1xf32> to vector<8x256xf32>
    %403 = arith.mulf %401, %402 : vector<8x256xf32>
    %404 = arith.addf %399, %403 : vector<8x256xf32>
    %cst_120 = arith.constant dense<0.000000e+00> : vector<8xf32>
    %405 = vector.multi_reduction <add>, %404, %cst_120 [1] : vector<8x256xf32> to vector<8xf32>
    %406 = vector.shape_cast %405 : vector<8xf32> to vector<8x1xf32>
    %407 = arith.mulf %404, %404 : vector<8x256xf32>
    %cst_121 = arith.constant dense<0.000000e+00> : vector<8xf32>
    %408 = vector.multi_reduction <add>, %407, %cst_121 [1] : vector<8x256xf32> to vector<8xf32>
    %409 = vector.shape_cast %408 : vector<8xf32> to vector<8x1xf32>
    %410 = arith.addf %320, %406 : vector<8x1xf32>
    %411 = arith.addf %323, %409 : vector<8x1xf32>
    %cst_122 = arith.constant 0.001953125 : f32
    %412 = vector.broadcast %cst_122 : f32 to vector<8x1xf32>
    %413 = arith.mulf %410, %412 : vector<8x1xf32>
    %cst_123 = arith.constant 0.001953125 : f32
    %414 = vector.broadcast %cst_123 : f32 to vector<8x1xf32>
    %415 = arith.mulf %411, %414 : vector<8x1xf32>
    %416 = arith.mulf %413, %413 : vector<8x1xf32>
    %417 = arith.subf %415, %416 : vector<8x1xf32>
    %cst_124 = arith.constant 9.99999974E-6 : f32
    %418 = vector.broadcast %cst_124 : f32 to vector<8x1xf32>
    %419 = arith.addf %417, %418 : vector<8x1xf32>
    %420 = math.rsqrt %419 : vector<8x1xf32>
    %421 = arith.mulf %235, %420 : vector<8x1xf32>
    %422 = arith.mulf %413, %421 : vector<8x1xf32>
    %423 = arith.subf %237, %422 : vector<8x1xf32>
    %424 = vector.broadcast %421 : vector<8x1xf32> to vector<8x256xf32>
    %425 = arith.mulf %318, %424 : vector<8x256xf32>
    %426 = vector.broadcast %423 : vector<8x1xf32> to vector<8x256xf32>
    %427 = arith.addf %425, %426 : vector<8x256xf32>
    %cst_125 = arith.constant 0.000000e+00 : f32
    %428 = vector.broadcast %cst_125 : f32 to vector<8x256xf32>
    %429 = arith.maximumf %427, %428 : vector<8x256xf32>
    %430 = vector.broadcast %421 : vector<8x1xf32> to vector<8x256xf32>
    %431 = arith.mulf %404, %430 : vector<8x256xf32>
    %432 = vector.broadcast %423 : vector<8x1xf32> to vector<8x256xf32>
    %433 = arith.addf %431, %432 : vector<8x256xf32>
    %cst_126 = arith.constant 0.000000e+00 : f32
    %434 = vector.broadcast %cst_126 : f32 to vector<8x256xf32>
    %435 = arith.maximumf %433, %434 : vector<8x256xf32>
    %c0_127 = arith.constant 0 : index
    %c0_128 = arith.constant 0 : index
    %c0_129 = arith.constant 0 : index
    %436 = vector.load %arg4[%c0_127, %c0_128, %c0_129] : memref<2x8x256xf32, #tpu.memory_space<vmem>>, vector<1x8x256xf32>
    %437 = vector.shape_cast %436 : vector<1x8x256xf32> to vector<8x256xf32>
    %438 = vector.shape_cast %429 : vector<8x256xf32> to vector<1x8x256xf32>
    tpu.vector_store %arg4[%c0_127, %c0_128, %c0_129], %438 {strides = array<i32>} : memref<2x8x256xf32, #tpu.memory_space<vmem>>, vector<1x8x256xf32>,
    %c1_130 = arith.constant 1 : index
    %c0_131 = arith.constant 0 : index
    %c0_132 = arith.constant 0 : index
    %439 = vector.load %arg4[%c1_130, %c0_131, %c0_132] : memref<2x8x256xf32, #tpu.memory_space<vmem>>, vector<1x8x256xf32>
    %440 = vector.shape_cast %439 : vector<1x8x256xf32> to vector<8x256xf32>
    %441 = vector.shape_cast %435 : vector<8x256xf32> to vector<1x8x256xf32>
    tpu.vector_store %arg4[%c1_130, %c0_131, %c0_132], %441 {strides = array<i32>} : memref<2x8x256xf32, #tpu.memory_space<vmem>>, vector<1x8x256xf32>,
    return
  }
  func.func @transform_0(%arg0: i32) -> (i32, i32, i32) {
    %c0_i32 = arith.constant 0 : i32
    %c0_i32_0 = arith.constant 0 : i32
    %c0_i32_1 = arith.constant 0 : i32
    %c0_i32_2 = arith.constant 0 : i32
    return %c0_i32, %c0_i32_0, %c0_i32_1 : i32, i32, i32
  }
  func.func @transform_1(%arg0: i32) -> (i32, i32, i32) {
    %c0_i32 = arith.constant 0 : i32
    %c0_i32_0 = arith.constant 0 : i32
    %c0_i32_1 = arith.constant 0 : i32
    %c0_i32_2 = arith.constant 0 : i32
    return %c0_i32, %c0_i32_0, %c0_i32_1 : i32, i32, i32
  }
  func.func @transform_2(%arg0: i32) -> (i32, i32, i32) {
    %c0_i32 = arith.constant 0 : i32
    %c0_i32_0 = arith.constant 0 : i32
    %c0_i32_1 = arith.constant 0 : i32
    %c0_i32_2 = arith.constant 0 : i32
    return %c0_i32, %c0_i32_0, %c0_i32_1 : i32, i32, i32
  }
  func.func @transform_3(%arg0: i32) -> (i32, i32, i32) {
    %c0_i32 = arith.constant 0 : i32
    %c0_i32_0 = arith.constant 0 : i32
    %c0_i32_1 = arith.constant 0 : i32
    %c0_i32_2 = arith.constant 0 : i32
    return %c0_i32, %c0_i32_0, %c0_i32_1 : i32, i32, i32
  }
}

</mosaic_0001>

<llo_original>
// kernel: dws_conv_bn_relu_block.1
$region0: #{dws_conv_bn_relu_block.1}
  #allocation0 [shape = 'u32[]', space=smem, size = 0x4, offset = 0x4, fixed_abs, tag = 'smem constant byte address 0x4 - core index']
  #allocation1 [shape = 'u32[144,128]{1,0:T(1,128)}', space=vmem, size = 0x12000, scoped, tag = 'internal scratch']
  %s0 = inlined_call_operand.vmem [shape: f32[2,4,256], index: 0, kind: input, shape index: {}]
  %s1 = inlined_call_operand.vmem [shape: f32[4,1,256], index: 1, kind: input, shape index: {}]
  %s2 = inlined_call_operand.vmem [shape: f32[34,8,1], index: 2, kind: input, shape index: {}]
  %s3 = inlined_call_operand.vmem [shape: f32[2,8,256], index: 3, kind: output, shape index: {}]
  %s4 = sld [smem:[#allocation0]]
  $region22: #{dws_conv_bn_relu_block.1} parent=0
    _
  %s6 = ssub.s32 1, %s4
  %s7 = scalar_select 0, %s6, %s4
  // Predicated region
  $region2: #{dws_conv_bn_relu_block.1} parent=0 // pred_check
    _
  $region3: #{dws_conv_bn_relu_block.1} parent=0 // pred_check_branch
    %9 = sbr.rel (0) target = $region5
  $region4: #{dws_conv_bn_relu_block.1} parent=0 // pred_region
    _
  $region5: #{dws_conv_bn_relu_block.1} parent=0 // pred_fallthru
    _
  // Predicated region
  $region6: #{dws_conv_bn_relu_block.1} parent=0 // pred_check
    _
  $region7: #{dws_conv_bn_relu_block.1} parent=0 // pred_check_branch
    %11 = sbr.rel (0) target = $region9
  $region8: #{dws_conv_bn_relu_block.1} parent=0 // pred_region
    _
  $region9: #{dws_conv_bn_relu_block.1} parent=0 // pred_fallthru
    _
  // Predicated region
  $region10: #{dws_conv_bn_relu_block.1} parent=0 // pred_check
    _
  $region11: #{dws_conv_bn_relu_block.1} parent=0 // pred_check_branch
    %13 = sbr.rel (0) target = $region13
  $region12: #{dws_conv_bn_relu_block.1} parent=0 // pred_region
    _
  $region13: #{dws_conv_bn_relu_block.1} parent=0 // pred_fallthru
    _
  %v14 = vld [vmem:[%s1] sm:$0x3]
  %s15 = scalar_lea.vmem %s1, 2
  %v16 = vld [vmem:[%s15] sm:$0x3]
  %s17 = scalar_lea.vmem %s1, 4
  %v18 = vld [vmem:[%s17] sm:$0x3]
  %s19 = scalar_lea.vmem %s1, 6
  %v20 = vld [vmem:[%s19] sm:$0x3]
  %v21 = vld [vmem:[%s0] sm:$0xff]
  %s22 = scalar_lea.vmem %s0, 8
  %v23 = vld [vmem:[%s22] sm:$0xff]
  %v24 = vld [vmem:[%s2] sm:$0xf]
  %s25 = scalar_lea.vmem %s2, 8
  %v26 = vld [vmem:[%s25] sm:$0xf]
  %s27 = scalar_lea.vmem %s2, 16
  %v28 = vld [vmem:[%s27] sm:$0xf]
  %s29 = scalar_lea.vmem %s2, 24
  %v30 = vld [vmem:[%s29] sm:$0xf]
  %s31 = scalar_lea.vmem %s2, 32
  %v32 = vld [vmem:[%s31] sm:$0xf]
  %s33 = scalar_lea.vmem %s2, 40
  %v34 = vld [vmem:[%s33] sm:$0xf]
  %s35 = scalar_lea.vmem %s2, 48
  %v36 = vld [vmem:[%s35] sm:$0xf]
  %s37 = scalar_lea.vmem %s2, 56
  %v38 = vld [vmem:[%s37] sm:$0xf]
  %s39 = scalar_lea.vmem %s2, 64
  %v40 = vld [vmem:[%s39] sm:$0xf]
  %s41 = scalar_lea.vmem %s2, 72
  %v42 = vld [vmem:[%s41] sm:$0xff]
  %s43 = scalar_lea.vmem %s2, 80
  %v44 = vld [vmem:[%s43] sm:$0xff]
  %s45 = scalar_lea.vmem %s2, 88
  %v46 = vld [vmem:[%s45] sm:$0xff]
  %s47 = scalar_lea.vmem %s2, 96
  %v48 = vld [vmem:[%s47] sm:$0xff]
  %s49 = scalar_lea.vmem %s2, 240
  %v50 = vld [vmem:[%s49] sm:$0xff]
  %s51 = scalar_lea.vmem %s2, 248
  %v52 = vld [vmem:[%s51] sm:$0xff]
  %v54 = vlaneseq
  %v55 = vshrl.u32 %v54, 7
  %v56 = vsub.s32 0, %v55
  %v57 = vrot.slane %v16, %v56
  %v58 = vlaneseq
  %v59 = vshrl.u32 %v58, 7
  %v60 = vsub.s32 1, %v59
  %v61 = vrot.slane %v16, %v60
  %v62 = vcombine.low %v57, %v61
  %v64 = vmul.f32 %v21, %v62
  %v66 = vlaneseq
  %v67 = vshrl.u32 %v66, 7
  %v68 = vsub.s32 0, %v67
  %v69 = vrot.slane %v14, %v68
  %v70 = vlaneseq
  %v71 = vshrl.u32 %v70, 7
  %v72 = vsub.s32 1, %v71
  %v73 = vrot.slane %v14, %v72
  %v74 = vcombine.low %v69, %v73
  %v76 = vmul.f32 %v21, %v74
  %v78 = vcombine.high %v64, %v64
  %80 = vrot.lane.b32.xlu0 %v64, 17
  %v81 = vpop.permute.xlu0 %80
  %82 = vrot.lane.b32.xlu0 %v78, 17
  %v83 = vpop.permute.xlu0 %82
  %v84 = vlaneseq
  %v85 = vand.u32 %v84, 127
  %vm86 = vcmp.lt.s32.totalorder %v85, 17
  %v87 = vsel %vm86, %v81, %v83
  %v88 = vsel %vm86, %v83, %v81
  %90 = vset.pattern.permute.xlu0 0
  %91 = vperm.xlu0 %90, %v24
  %v92 = vpop.permute.xlu0 %91
  %v94 = vmul.f32 %v88, %v92
  %v95 = vmul.f32 %v87, %v92
  %v97 = vcombine.high %v21, %v21
  %99 = vrot.lane.b32.xlu0 %v21, 16
  %v100 = vpop.permute.xlu0 %99
  %101 = vrot.lane.b32.xlu0 %v97, 16
  %v102 = vpop.permute.xlu0 %101
  %vm103 = vcmp.lt.s32.totalorder %v85, 16
  %v104 = vsel %vm103, %v100, %v102
  %v105 = vsel %vm103, %v102, %v100
  %107 = vset.pattern.permute.xlu0 0
  %108 = vperm.xlu0 %107, %v26
  %v109 = vpop.permute.xlu0 %108
  %v111 = vmul.f32 %v105, %v109
  %v112 = vmul.f32 %v104, %v109
  %v113 = vadd.f32 %v94, %v111
  %v114 = vadd.f32 %v95, %v112
  %v116 = vcombine.high %v76, %v76
  %118 = vrot.lane.b32.xlu0 %v76, 15
  %v119 = vpop.permute.xlu0 %118
  %120 = vrot.lane.b32.xlu0 %v116, 15
  %v121 = vpop.permute.xlu0 %120
  %vm122 = vcmp.lt.s32.totalorder %v85, 15
  %v123 = vsel %vm122, %v119, %v121
  %v124 = vsel %vm122, %v121, %v119
  %126 = vset.pattern.permute.xlu0 0
  %127 = vperm.xlu0 %126, %v28
  %v128 = vpop.permute.xlu0 %127
  %v130 = vmul.f32 %v124, %v128
  %v131 = vmul.f32 %v123, %v128
  %v132 = vadd.f32 %v113, %v130
  %v133 = vadd.f32 %v114, %v131
  %v135 = vlaneseq
  %v136 = vshrl.u32 %v135, 7
  %v137 = vsub.s32 0, %v136
  %v138 = vrot.slane %v18, %v137
  %v139 = vlaneseq
  %v140 = vshrl.u32 %v139, 7
  %v141 = vsub.s32 1, %v140
  %v142 = vrot.slane %v18, %v141
  %v145 = vmul.f32 %v132, %v138
  %v146 = vmul.f32 %v133, %v142
  %147 = vrot.lane.b32.xlu0 %v64, 1
  %v148 = vpop.permute.xlu0 %147
  %149 = vrot.lane.b32.xlu0 %v78, 1
  %v150 = vpop.permute.xlu0 %149
  %vm151 = vcmp.lt.s32.totalorder %v85, 1
  %v152 = vsel %vm151, %v148, %v150
  %v153 = vsel %vm151, %v150, %v148
  %155 = vset.pattern.permute.xlu0 0
  %156 = vperm.xlu0 %155, %v30
  %v157 = vpop.permute.xlu0 %156
  %v159 = vmul.f32 %v153, %v157
  %v160 = vmul.f32 %v152, %v157
  %162 = vset.pattern.permute.xlu0 0
  %163 = vperm.xlu0 %162, %v32
  %v164 = vpop.permute.xlu0 %163
  %v166 = vunpack.c.l.s4 839922192
  %v167 = vunpack.c.0.s8 %v166
  %v168 = vlaneseq
  %v169 = vshrl.u32 %v168, 7
  %v170 = vsub.s32 %v167, %v169
  %v171 = vrot.slane %v164, %v170
  %v173 = vmul.f32 %v21, %v171
  %v175 = vcombine.high %v173, %v173
  %v177 = vadd.f32 %v159, %v173
  %v178 = vadd.f32 %v160, %v175
  %179 = vrot.lane.b32.xlu0 %v76, 127
  %v180 = vpop.permute.xlu0 %179
  %181 = vrot.lane.b32.xlu0 %v116, 127
  %v182 = vpop.permute.xlu0 %181
  %vm183 = vcmp.lt.s32.totalorder %v85, 127
  %v184 = vsel %vm183, %v180, %v182
  %v185 = vsel %vm183, %v182, %v180
  %187 = vset.pattern.permute.xlu0 0
  %188 = vperm.xlu0 %187, %v34
  %v189 = vpop.permute.xlu0 %188
  %v191 = vmul.f32 %v184, %v189
  %v192 = vmul.f32 %v185, %v189
  %v193 = vadd.f32 %v177, %v191
  %v194 = vadd.f32 %v178, %v192
  %v195 = vadd.f32 %v145, %v193
  %v196 = vadd.f32 %v146, %v194
  %197 = vrot.lane.b32.xlu0 %v64, 113
  %v198 = vpop.permute.xlu0 %197
  %199 = vrot.lane.b32.xlu0 %v78, 113
  %v200 = vpop.permute.xlu0 %199
  %vm201 = vcmp.lt.s32.totalorder %v85, 113
  %v202 = vsel %vm201, %v198, %v200
  %v203 = vsel %vm201, %v200, %v198
  %205 = vset.pattern.permute.xlu0 0
  %206 = vperm.xlu0 %205, %v36
  %v207 = vpop.permute.xlu0 %206
  %v209 = vmul.f32 %v202, %v207
  %v210 = vmul.f32 %v203, %v207
  %211 = vrot.lane.b32.xlu0 %v21, 112
  %v212 = vpop.permute.xlu0 %211
  %213 = vrot.lane.b32.xlu0 %v97, 112
  %v214 = vpop.permute.xlu0 %213
  %vm215 = vcmp.lt.s32.totalorder %v85, 112
  %v216 = vsel %vm215, %v212, %v214
  %v217 = vsel %vm215, %v214, %v212
  %219 = vset.pattern.permute.xlu0 0
  %220 = vperm.xlu0 %219, %v38
  %v221 = vpop.permute.xlu0 %220
  %v223 = vmul.f32 %v216, %v221
  %v224 = vmul.f32 %v217, %v221
  %v225 = vadd.f32 %v209, %v223
  %v226 = vadd.f32 %v210, %v224
  %227 = vrot.lane.b32.xlu0 %v76, 111
  %v228 = vpop.permute.xlu0 %227
  %229 = vrot.lane.b32.xlu0 %v116, 111
  %v230 = vpop.permute.xlu0 %229
  %vm231 = vcmp.lt.s32.totalorder %v85, 111
  %v232 = vsel %vm231, %v228, %v230
  %v233 = vsel %vm231, %v230, %v228
  %235 = vset.pattern.permute.xlu0 0
  %236 = vperm.xlu0 %235, %v40
  %v237 = vpop.permute.xlu0 %236
  %v239 = vmul.f32 %v232, %v237
  %v240 = vmul.f32 %v233, %v237
  %v241 = vadd.f32 %v225, %v239
  %v242 = vadd.f32 %v226, %v240
  %v244 = vlaneseq
  %v245 = vshrl.u32 %v244, 7
  %v246 = vsub.s32 0, %v245
  %v247 = vrot.slane %v20, %v246
  %v248 = vlaneseq
  %v249 = vshrl.u32 %v248, 7
  %v250 = vsub.s32 1, %v249
  %v251 = vrot.slane %v20, %v250
  %v254 = vmul.f32 %v241, %v247
  %v255 = vmul.f32 %v242, %v251
  %v256 = vadd.f32 %v195, %v254
  %v257 = vadd.f32 %v196, %v255
  %v258 = vlaneseq
  %v259 = vshrl.u32 %v258, 7
  %v260 = vsub.s32 0, %v259
  %v261 = vrot.slane %v256, %v260
  %v262 = vlaneseq
  %v263 = vshrl.u32 %v262, 7
  %v264 = vsub.s32 0, %v263
  %v265 = vrot.slane %v257, %v264
  %267 = vset.pattern.permute.xlu0 0
  %268 = vperm.xlu0 %267, %v42
  %v269 = vpop.permute.xlu0 %268
  %v271 = vmul.f32 %v261, %v269
  %v272 = vmul.f32 %v265, %v269
  %v273 = vlaneseq
  %v274 = vshrl.u32 %v273, 7
  %v275 = vsub.s32 1, %v274
  %v276 = vrot.slane %v256, %v275
  %v277 = vlaneseq
  %v278 = vshrl.u32 %v277, 7
  %v279 = vsub.s32 1, %v278
  %v280 = vrot.slane %v257, %v279
  %282 = vset.pattern.permute.xlu0 0
  %283 = vperm.xlu0 %282, %v44
  %v284 = vpop.permute.xlu0 %283
  %v286 = vmul.f32 %v276, %v284
  %v287 = vmul.f32 %v280, %v284
  %v288 = vadd.f32 %v271, %v286
  %v289 = vadd.f32 %v272, %v287
  %v290 = vlaneseq
  %v291 = vshrl.u32 %v290, 7
  %v292 = vsub.s32 2, %v291
  %v293 = vrot.slane %v256, %v292
  %v294 = vlaneseq
  %v295 = vshrl.u32 %v294, 7
  %v296 = vsub.s32 2, %v295
  %v297 = vrot.slane %v257, %v296
  %299 = vset.pattern.permute.xlu0 0
  %300 = vperm.xlu0 %299, %v46
  %v301 = vpop.permute.xlu0 %300
  %v303 = vmul.f32 %v293, %v301
  %v304 = vmul.f32 %v297, %v301
  %v305 = vadd.f32 %v288, %v303
  %v306 = vadd.f32 %v289, %v304
  %v307 = vlaneseq
  %v308 = vshrl.u32 %v307, 7
  %v309 = vsub.s32 3, %v308
  %v310 = vrot.slane %v256, %v309
  %v311 = vlaneseq
  %v312 = vshrl.u32 %v311, 7
  %v313 = vsub.s32 3, %v312
  %v314 = vrot.slane %v257, %v313
  %316 = vset.pattern.permute.xlu0 0
  %317 = vperm.xlu0 %316, %v48
  %v318 = vpop.permute.xlu0 %317
  %v320 = vmul.f32 %v310, %v318
  %v321 = vmul.f32 %v314, %v318
  %v322 = vadd.f32 %v305, %v320
  %v323 = vadd.f32 %v306, %v321
  %v324 = vadd.f32 %v322, %v323
  %325 = vadd.xlane.f32.xlu0 %v324
  %v326 = vpop.xlane.xlu0 %325
  %v327 = vmul.f32 %v322, %v322
  %v328 = vmul.f32 %v323, %v323
  %v329 = vadd.f32 %v327, %v328
  %330 = vadd.xlane.f32.xlu0 %v329
  %v331 = vpop.xlane.xlu0 %330
  %v332 = vmul.f32 %v23, %v62
  %v333 = vmul.f32 %v23, %v74
  %v335 = vcombine.high %v332, %v332
  %337 = vrot.lane.b32.xlu0 %v332, 17
  %v338 = vpop.permute.xlu0 %337
  %339 = vrot.lane.b32.xlu0 %v335, 17
  %v340 = vpop.permute.xlu0 %339
  %v341 = vsel %vm86, %v338, %v340
  %v342 = vsel %vm86, %v340, %v338
  %v343 = vmul.f32 %v342, %v92
  %v344 = vmul.f32 %v341, %v92
  %v346 = vcombine.high %v23, %v23
  %348 = vrot.lane.b32.xlu0 %v23, 16
  %v349 = vpop.permute.xlu0 %348
  %350 = vrot.lane.b32.xlu0 %v346, 16
  %v351 = vpop.permute.xlu0 %350
  %v352 = vsel %vm103, %v349, %v351
  %v353 = vsel %vm103, %v351, %v349
  %v354 = vmul.f32 %v353, %v109
  %v355 = vmul.f32 %v352, %v109
  %v356 = vadd.f32 %v343, %v354
  %v357 = vadd.f32 %v344, %v355
  %v359 = vcombine.high %v333, %v333
  %361 = vrot.lane.b32.xlu0 %v333, 15
  %v362 = vpop.permute.xlu0 %361
  %363 = vrot.lane.b32.xlu0 %v359, 15
  %v364 = vpop.permute.xlu0 %363
  %v365 = vsel %vm122, %v362, %v364
  %v366 = vsel %vm122, %v364, %v362
  %v367 = vmul.f32 %v366, %v128
  %v368 = vmul.f32 %v365, %v128
  %v369 = vadd.f32 %v356, %v367
  %v370 = vadd.f32 %v357, %v368
  %v371 = vmul.f32 %v369, %v138
  %v372 = vmul.f32 %v370, %v142
  %373 = vrot.lane.b32.xlu0 %v332, 1
  %v374 = vpop.permute.xlu0 %373
  %375 = vrot.lane.b32.xlu0 %v335, 1
  %v376 = vpop.permute.xlu0 %375
  %v377 = vsel %vm151, %v374, %v376
  %v378 = vsel %vm151, %v376, %v374
  %v379 = vmul.f32 %v378, %v157
  %v380 = vmul.f32 %v377, %v157
  %v381 = vmul.f32 %v23, %v171
  %v383 = vcombine.high %v381, %v381
  %v385 = vadd.f32 %v379, %v381
  %v386 = vadd.f32 %v380, %v383
  %387 = vrot.lane.b32.xlu0 %v333, 127
  %v388 = vpop.permute.xlu0 %387
  %389 = vrot.lane.b32.xlu0 %v359, 127
  %v390 = vpop.permute.xlu0 %389
  %v391 = vsel %vm183, %v388, %v390
  %v392 = vsel %vm183, %v390, %v388
  %v393 = vmul.f32 %v391, %v189
  %v394 = vmul.f32 %v392, %v189
  %v395 = vadd.f32 %v385, %v393
  %v396 = vadd.f32 %v386, %v394
  %v397 = vadd.f32 %v371, %v395
  %v398 = vadd.f32 %v372, %v396
  %399 = vrot.lane.b32.xlu0 %v332, 113
  %v400 = vpop.permute.xlu0 %399
  %401 = vrot.lane.b32.xlu0 %v335, 113
  %v402 = vpop.permute.xlu0 %401
  %v403 = vsel %vm201, %v400, %v402
  %v404 = vsel %vm201, %v402, %v400
  %v405 = vmul.f32 %v403, %v207
  %v406 = vmul.f32 %v404, %v207
  %407 = vrot.lane.b32.xlu0 %v23, 112
  %v408 = vpop.permute.xlu0 %407
  %409 = vrot.lane.b32.xlu0 %v346, 112
  %v410 = vpop.permute.xlu0 %409
  %v411 = vsel %vm215, %v408, %v410
  %v412 = vsel %vm215, %v410, %v408
  %v413 = vmul.f32 %v411, %v221
  %v414 = vmul.f32 %v412, %v221
  %v415 = vadd.f32 %v405, %v413
  %v416 = vadd.f32 %v406, %v414
  %417 = vrot.lane.b32.xlu0 %v333, 111
  %v418 = vpop.permute.xlu0 %417
  %419 = vrot.lane.b32.xlu0 %v359, 111
  %v420 = vpop.permute.xlu0 %419
  %v421 = vsel %vm231, %v418, %v420
  %v422 = vsel %vm231, %v420, %v418
  %v423 = vmul.f32 %v421, %v237
  %v424 = vmul.f32 %v422, %v237
  %v425 = vadd.f32 %v415, %v423
  %v426 = vadd.f32 %v416, %v424
  %v427 = vmul.f32 %v425, %v247
  %v428 = vmul.f32 %v426, %v251
  %v429 = vadd.f32 %v397, %v427
  %v430 = vadd.f32 %v398, %v428
  %v431 = vlaneseq
  %v432 = vshrl.u32 %v431, 7
  %v433 = vsub.s32 0, %v432
  %v434 = vrot.slane %v429, %v433
  %v435 = vlaneseq
  %v436 = vshrl.u32 %v435, 7
  %v437 = vsub.s32 0, %v436
  %v438 = vrot.slane %v430, %v437
  %v439 = vmul.f32 %v434, %v269
  %v440 = vmul.f32 %v438, %v269
  %v441 = vlaneseq
  %v442 = vshrl.u32 %v441, 7
  %v443 = vsub.s32 1, %v442
  %v444 = vrot.slane %v429, %v443
  %v445 = vlaneseq
  %v446 = vshrl.u32 %v445, 7
  %v447 = vsub.s32 1, %v446
  %v448 = vrot.slane %v430, %v447
  %v449 = vmul.f32 %v444, %v284
  %v450 = vmul.f32 %v448, %v284
  %v451 = vadd.f32 %v439, %v449
  %v452 = vadd.f32 %v440, %v450
  %v453 = vlaneseq
  %v454 = vshrl.u32 %v453, 7
  %v455 = vsub.s32 2, %v454
  %v456 = vrot.slane %v429, %v455
  %v457 = vlaneseq
  %v458 = vshrl.u32 %v457, 7
  %v459 = vsub.s32 2, %v458
  %v460 = vrot.slane %v430, %v459
  %v461 = vmul.f32 %v456, %v301
  %v462 = vmul.f32 %v460, %v301
  %v463 = vadd.f32 %v451, %v461
  %v464 = vadd.f32 %v452, %v462
  %v465 = vlaneseq
  %v466 = vshrl.u32 %v465, 7
  %v467 = vsub.s32 3, %v466
  %v468 = vrot.slane %v429, %v467
  %v469 = vlaneseq
  %v470 = vshrl.u32 %v469, 7
  %v471 = vsub.s32 3, %v470
  %v472 = vrot.slane %v430, %v471
  %v473 = vmul.f32 %v468, %v318
  %v474 = vmul.f32 %v472, %v318
  %v475 = vadd.f32 %v463, %v473
  %v476 = vadd.f32 %v464, %v474
  %v477 = vadd.f32 %v475, %v476
  %478 = vadd.xlane.f32.xlu0 %v477
  %v479 = vpop.xlane.xlu0 %478
  %v480 = vmul.f32 %v475, %v475
  %v481 = vmul.f32 %v476, %v476
  %v482 = vadd.f32 %v480, %v481
  %483 = vadd.xlane.f32.xlu0 %v482
  %v484 = vpop.xlane.xlu0 %483
  %v485 = vadd.f32 %v326, %v479
  %v486 = vadd.f32 %v331, %v484
  %v487 = vmul.f32 %v485, 0.001953125
  %v488 = vmul.f32 %v486, 0.001953125
  %v489 = vmul.f32 %v487, %v487
  %v490 = vsub.f32 %v488, %v489
  %v491 = vadd.f32 %v490, 1e-05
  %v492 = vrsqrt.pop %v491
  %v493 = vmul.f32 %v50, %v492
  %v494 = vmul.f32 %v487, %v493
  %v495 = vsub.f32 %v52, %v494
  %497 = vset.pattern.permute.xlu0 0
  %498 = vperm.xlu0 %497, %v493
  %v499 = vpop.permute.xlu0 %498
  %v501 = vmul.f32 %v322, %v499
  %v502 = vmul.f32 %v323, %v499
  %504 = vset.pattern.permute.xlu0 0
  %505 = vperm.xlu0 %504, %v495
  %v506 = vpop.permute.xlu0 %505
  %v508 = vadd.f32 %v501, %v506
  %v509 = vadd.f32 %v502, %v506
  %v510 = vmax.f32 %v508, 0.0
  %v511 = vmax.f32 %v509, 0.0
  %v512 = vmul.f32 %v475, %v499
  %v513 = vmul.f32 %v476, %v499
  %v514 = vadd.f32 %v512, %v506
  %v515 = vadd.f32 %v513, %v506
  %v516 = vmax.f32 %v514, 0.0
  %v517 = vmax.f32 %v515, 0.0
  %s518 = scalar_lea.vmem %s2, 104
  %v519 = vld [vmem:[%s518] sm:$0xff]
  %s520 = scalar_lea.vmem %s2, 112
  %v521 = vld [vmem:[%s520] sm:$0xff]
  %s522 = scalar_lea.vmem %s2, 120
  %v523 = vld [vmem:[%s522] sm:$0xff]
  %s524 = scalar_lea.vmem %s2, 128
  %v525 = vld [vmem:[%s524] sm:$0xff]
  %s526 = scalar_lea.vmem %s2, 136
  %v527 = vld [vmem:[%s526] sm:$0xff]
  %s528 = scalar_lea.vmem %s2, 144
  %v529 = vld [vmem:[%s528] sm:$0xff]
  %s530 = scalar_lea.vmem %s2, 152
  %v531 = vld [vmem:[%s530] sm:$0xff]
  %s532 = scalar_lea.vmem %s2, 160
  %v533 = vld [vmem:[%s532] sm:$0xff]
  %s534 = scalar_lea.vmem %s2, 168
  %v535 = vld [vmem:[%s534] sm:$0xff]
  %s536 = scalar_lea.vmem %s2, 176
  %v537 = vld [vmem:[%s536] sm:$0xff]
  %s538 = scalar_lea.vmem %s2, 184
  %v539 = vld [vmem:[%s538] sm:$0xff]
  %s540 = scalar_lea.vmem %s2, 192
  %v541 = vld [vmem:[%s540] sm:$0xff]
  %s542 = scalar_lea.vmem %s2, 200
  %v543 = vld [vmem:[%s542] sm:$0xff]
  %s544 = scalar_lea.vmem %s2, 208
  %v545 = vld [vmem:[%s544] sm:$0xff]
  %s546 = scalar_lea.vmem %s2, 216
  %v547 = vld [vmem:[%s546] sm:$0xff]
  %s548 = scalar_lea.vmem %s2, 224
  %v549 = vld [vmem:[%s548] sm:$0xff]
  %s550 = scalar_lea.vmem %s2, 232
  %v551 = vld [vmem:[%s550] sm:$0xff]
  %s552 = scalar_lea.vmem %s2, 256
  %v553 = vld [vmem:[%s552] sm:$0xff]
  %s554 = scalar_lea.vmem %s2, 264
  %v555 = vld [vmem:[%s554] sm:$0xff]
  %v558 = vmul.f32 %v510, %v57
  %v559 = vmul.f32 %v511, %v61
  %v562 = vmul.f32 %v510, %v69
  %v563 = vmul.f32 %v511, %v73
  %564 = vrot.lane.b32.xlu0 %v558, 17
  %v565 = vpop.permute.xlu0 %564
  %566 = vrot.lane.b32.xlu0 %v559, 17
  %v567 = vpop.permute.xlu0 %566
  %v568 = vsel %vm86, %v565, %v567
  %v569 = vsel %vm86, %v567, %v565
  %571 = vset.pattern.permute.xlu0 0
  %572 = vperm.xlu0 %571, %v519
  %v573 = vpop.permute.xlu0 %572
  %v575 = vmul.f32 %v569, %v573
  %v576 = vmul.f32 %v568, %v573
  %577 = vrot.lane.b32.xlu0 %v510, 16
  %v578 = vpop.permute.xlu0 %577
  %579 = vrot.lane.b32.xlu0 %v511, 16
  %v580 = vpop.permute.xlu0 %579
  %v581 = vsel %vm103, %v578, %v580
  %v582 = vsel %vm103, %v580, %v578
  %584 = vset.pattern.permute.xlu0 0
  %585 = vperm.xlu0 %584, %v521
  %v586 = vpop.permute.xlu0 %585
  %v588 = vmul.f32 %v582, %v586
  %v589 = vmul.f32 %v581, %v586
  %v590 = vadd.f32 %v575, %v588
  %v591 = vadd.f32 %v576, %v589
  %592 = vrot.lane.b32.xlu0 %v562, 15
  %v593 = vpop.permute.xlu0 %592
  %594 = vrot.lane.b32.xlu0 %v563, 15
  %v595 = vpop.permute.xlu0 %594
  %v596 = vsel %vm122, %v593, %v595
  %v597 = vsel %vm122, %v595, %v593
  %599 = vset.pattern.permute.xlu0 0
  %600 = vperm.xlu0 %599, %v523
  %v601 = vpop.permute.xlu0 %600
  %v603 = vmul.f32 %v597, %v601
  %v604 = vmul.f32 %v596, %v601
  %v605 = vadd.f32 %v590, %v603
  %v606 = vadd.f32 %v591, %v604
  %v607 = vmul.f32 %v605, %v138
  %v608 = vmul.f32 %v606, %v142
  %609 = vrot.lane.b32.xlu0 %v558, 1
  %v610 = vpop.permute.xlu0 %609
  %611 = vrot.lane.b32.xlu0 %v559, 1
  %v612 = vpop.permute.xlu0 %611
  %v613 = vsel %vm151, %v610, %v612
  %v614 = vsel %vm151, %v612, %v610
  %616 = vset.pattern.permute.xlu0 0
  %617 = vperm.xlu0 %616, %v525
  %v618 = vpop.permute.xlu0 %617
  %v620 = vmul.f32 %v614, %v618
  %v621 = vmul.f32 %v613, %v618
  %623 = vset.pattern.permute.xlu0 0
  %624 = vperm.xlu0 %623, %v527
  %v625 = vpop.permute.xlu0 %624
  %v627 = vmul.f32 %v510, %v625
  %v628 = vmul.f32 %v511, %v625
  %v629 = vadd.f32 %v620, %v627
  %v630 = vadd.f32 %v621, %v628
  %631 = vrot.lane.b32.xlu0 %v562, 127
  %v632 = vpop.permute.xlu0 %631
  %633 = vrot.lane.b32.xlu0 %v563, 127
  %v634 = vpop.permute.xlu0 %633
  %v635 = vsel %vm183, %v632, %v634
  %v636 = vsel %vm183, %v634, %v632
  %638 = vset.pattern.permute.xlu0 0
  %639 = vperm.xlu0 %638, %v529
  %v640 = vpop.permute.xlu0 %639
  %v642 = vmul.f32 %v635, %v640
  %v643 = vmul.f32 %v636, %v640
  %v644 = vadd.f32 %v629, %v642
  %v645 = vadd.f32 %v630, %v643
  %v646 = vadd.f32 %v607, %v644
  %v647 = vadd.f32 %v608, %v645
  %648 = vrot.lane.b32.xlu0 %v558, 113
  %v649 = vpop.permute.xlu0 %648
  %650 = vrot.lane.b32.xlu0 %v559, 113
  %v651 = vpop.permute.xlu0 %650
  %v652 = vsel %vm201, %v649, %v651
  %v653 = vsel %vm201, %v651, %v649
  %655 = vset.pattern.permute.xlu0 0
  %656 = vperm.xlu0 %655, %v531
  %v657 = vpop.permute.xlu0 %656
  %v659 = vmul.f32 %v652, %v657
  %v660 = vmul.f32 %v653, %v657
  %661 = vrot.lane.b32.xlu0 %v510, 112
  %v662 = vpop.permute.xlu0 %661
  %663 = vrot.lane.b32.xlu0 %v511, 112
  %v664 = vpop.permute.xlu0 %663
  %v665 = vsel %vm215, %v662, %v664
  %v666 = vsel %vm215, %v664, %v662
  %668 = vset.pattern.permute.xlu0 0
  %669 = vperm.xlu0 %668, %v533
  %v670 = vpop.permute.xlu0 %669
  %v672 = vmul.f32 %v665, %v670
  %v673 = vmul.f32 %v666, %v670
  %v674 = vadd.f32 %v659, %v672
  %v675 = vadd.f32 %v660, %v673
  %676 = vrot.lane.b32.xlu0 %v562, 111
  %v677 = vpop.permute.xlu0 %676
  %678 = vrot.lane.b32.xlu0 %v563, 111
  %v679 = vpop.permute.xlu0 %678
  %v680 = vsel %vm231, %v677, %v679
  %v681 = vsel %vm231, %v679, %v677
  %683 = vset.pattern.permute.xlu0 0
  %684 = vperm.xlu0 %683, %v535
  %v685 = vpop.permute.xlu0 %684
  %v687 = vmul.f32 %v680, %v685
  %v688 = vmul.f32 %v681, %v685
  %v689 = vadd.f32 %v674, %v687
  %v690 = vadd.f32 %v675, %v688
  %v691 = vmul.f32 %v689, %v247
  %v692 = vmul.f32 %v690, %v251
  %v693 = vadd.f32 %v646, %v691
  %v694 = vadd.f32 %v647, %v692
  %v695 = vlaneseq
  %v696 = vshrl.u32 %v695, 7
  %v697 = vsub.s32 0, %v696
  %v698 = vrot.slane %v693, %v697
  %v699 = vlaneseq
  %v700 = vshrl.u32 %v699, 7
  %v701 = vsub.s32 0, %v700
  %v702 = vrot.slane %v694, %v701
  %704 = vset.pattern.permute.xlu0 0
  %705 = vperm.xlu0 %704, %v537
  %v706 = vpop.permute.xlu0 %705
  %v708 = vmul.f32 %v698, %v706
  %v709 = vmul.f32 %v702, %v706
  %v710 = vlaneseq
  %v711 = vshrl.u32 %v710, 7
  %v712 = vsub.s32 1, %v711
  %v713 = vrot.slane %v693, %v712
  %v714 = vlaneseq
  %v715 = vshrl.u32 %v714, 7
  %v716 = vsub.s32 1, %v715
  %v717 = vrot.slane %v694, %v716
  %719 = vset.pattern.permute.xlu0 0
  %720 = vperm.xlu0 %719, %v539
  %v721 = vpop.permute.xlu0 %720
  %v723 = vmul.f32 %v713, %v721
  %v724 = vmul.f32 %v717, %v721
  %v725 = vadd.f32 %v708, %v723
  %v726 = vadd.f32 %v709, %v724
  %v727 = vlaneseq
  %v728 = vshrl.u32 %v727, 7
  %v729 = vsub.s32 2, %v728
  %v730 = vrot.slane %v693, %v729
  %v731 = vlaneseq
  %v732 = vshrl.u32 %v731, 7
  %v733 = vsub.s32 2, %v732
  %v734 = vrot.slane %v694, %v733
  %736 = vset.pattern.permute.xlu0 0
  %737 = vperm.xlu0 %736, %v541
  %v738 = vpop.permute.xlu0 %737
  %v740 = vmul.f32 %v730, %v738
  %v741 = vmul.f32 %v734, %v738
  %v742 = vadd.f32 %v725, %v740
  %v743 = vadd.f32 %v726, %v741
  %v744 = vlaneseq
  %v745 = vshrl.u32 %v744, 7
  %v746 = vsub.s32 3, %v745
  %v747 = vrot.slane %v693, %v746
  %v748 = vlaneseq
  %v749 = vshrl.u32 %v748, 7
  %v750 = vsub.s32 3, %v749
  %v751 = vrot.slane %v694, %v750
  %753 = vset.pattern.permute.xlu0 0
  %754 = vperm.xlu0 %753, %v543
  %v755 = vpop.permute.xlu0 %754
  %v757 = vmul.f32 %v747, %v755
  %v758 = vmul.f32 %v751, %v755
  %v759 = vadd.f32 %v742, %v757
  %v760 = vadd.f32 %v743, %v758
  %v761 = vlaneseq
  %v762 = vshrl.u32 %v761, 7
  %v763 = vsub.s32 4, %v762
  %v764 = vrot.slane %v693, %v763
  %v765 = vlaneseq
  %v766 = vshrl.u32 %v765, 7
  %v767 = vsub.s32 4, %v766
  %v768 = vrot.slane %v694, %v767
  %770 = vset.pattern.permute.xlu0 0
  %771 = vperm.xlu0 %770, %v545
  %v772 = vpop.permute.xlu0 %771
  %v774 = vmul.f32 %v764, %v772
  %v775 = vmul.f32 %v768, %v772
  %v776 = vadd.f32 %v759, %v774
  %v777 = vadd.f32 %v760, %v775
  %v778 = vlaneseq
  %v779 = vshrl.u32 %v778, 7
  %v780 = vsub.s32 5, %v779
  %v781 = vrot.slane %v693, %v780
  %v782 = vlaneseq
  %v783 = vshrl.u32 %v782, 7
  %v784 = vsub.s32 5, %v783
  %v785 = vrot.slane %v694, %v784
  %787 = vset.pattern.permute.xlu0 0
  %788 = vperm.xlu0 %787, %v547
  %v789 = vpop.permute.xlu0 %788
  %v791 = vmul.f32 %v781, %v789
  %v792 = vmul.f32 %v785, %v789
  %v793 = vadd.f32 %v776, %v791
  %v794 = vadd.f32 %v777, %v792
  %v795 = vlaneseq
  %v796 = vshrl.u32 %v795, 7
  %v797 = vsub.s32 6, %v796
  %v798 = vrot.slane %v693, %v797
  %v799 = vlaneseq
  %v800 = vshrl.u32 %v799, 7
  %v801 = vsub.s32 6, %v800
  %v802 = vrot.slane %v694, %v801
  %804 = vset.pattern.permute.xlu0 0
  %805 = vperm.xlu0 %804, %v549
  %v806 = vpop.permute.xlu0 %805
  %v808 = vmul.f32 %v798, %v806
  %v809 = vmul.f32 %v802, %v806
  %v810 = vadd.f32 %v793, %v808
  %v811 = vadd.f32 %v794, %v809
  %v812 = vlaneseq
  %v813 = vshrl.u32 %v812, 7
  %v814 = vsub.s32 7, %v813
  %v815 = vrot.slane %v693, %v814
  %v816 = vlaneseq
  %v817 = vshrl.u32 %v816, 7
  %v818 = vsub.s32 7, %v817
  %v819 = vrot.slane %v694, %v818
  %821 = vset.pattern.permute.xlu0 0
  %822 = vperm.xlu0 %821, %v551
  %v823 = vpop.permute.xlu0 %822
  %v825 = vmul.f32 %v815, %v823
  %v826 = vmul.f32 %v819, %v823
  %v827 = vadd.f32 %v810, %v825
  %v828 = vadd.f32 %v811, %v826
  %v829 = vadd.f32 %v827, %v828
  %830 = vadd.xlane.f32.xlu0 %v829
  %v831 = vpop.xlane.xlu0 %830
  %v832 = vmul.f32 %v827, %v827
  %v833 = vmul.f32 %v828, %v828
  %v834 = vadd.f32 %v832, %v833
  %835 = vadd.xlane.f32.xlu0 %v834
  %v836 = vpop.xlane.xlu0 %835
  %v837 = vmul.f32 %v516, %v57
  %v838 = vmul.f32 %v517, %v61
  %v839 = vmul.f32 %v516, %v69
  %v840 = vmul.f32 %v517, %v73
  %841 = vrot.lane.b32.xlu0 %v837, 17
  %v842 = vpop.permute.xlu0 %841
  %843 = vrot.lane.b32.xlu0 %v838, 17
  %v844 = vpop.permute.xlu0 %843
  %v845 = vsel %vm86, %v842, %v844
  %v846 = vsel %vm86, %v844, %v842
  %v847 = vmul.f32 %v846, %v573
  %v848 = vmul.f32 %v845, %v573
  %849 = vrot.lane.b32.xlu0 %v516, 16
  %v850 = vpop.permute.xlu0 %849
  %851 = vrot.lane.b32.xlu0 %v517, 16
  %v852 = vpop.permute.xlu0 %851
  %v853 = vsel %vm103, %v850, %v852
  %v854 = vsel %vm103, %v852, %v850
  %v855 = vmul.f32 %v854, %v586
  %v856 = vmul.f32 %v853, %v586
  %v857 = vadd.f32 %v847, %v855
  %v858 = vadd.f32 %v848, %v856
  %859 = vrot.lane.b32.xlu0 %v839, 15
  %v860 = vpop.permute.xlu0 %859
  %861 = vrot.lane.b32.xlu0 %v840, 15
  %v862 = vpop.permute.xlu0 %861
  %v863 = vsel %vm122, %v860, %v862
  %v864 = vsel %vm122, %v862, %v860
  %v865 = vmul.f32 %v864, %v601
  %v866 = vmul.f32 %v863, %v601
  %v867 = vadd.f32 %v857, %v865
  %v868 = vadd.f32 %v858, %v866
  %v869 = vmul.f32 %v867, %v138
  %v870 = vmul.f32 %v868, %v142
  %871 = vrot.lane.b32.xlu0 %v837, 1
  %v872 = vpop.permute.xlu0 %871
  %873 = vrot.lane.b32.xlu0 %v838, 1
  %v874 = vpop.permute.xlu0 %873
  %v875 = vsel %vm151, %v872, %v874
  %v876 = vsel %vm151, %v874, %v872
  %v877 = vmul.f32 %v876, %v618
  %v878 = vmul.f32 %v875, %v618
  %v879 = vmul.f32 %v516, %v625
  %v880 = vmul.f32 %v517, %v625
  %v881 = vadd.f32 %v877, %v879
  %v882 = vadd.f32 %v878, %v880
  %883 = vrot.lane.b32.xlu0 %v839, 127
  %v884 = vpop.permute.xlu0 %883
  %885 = vrot.lane.b32.xlu0 %v840, 127
  %v886 = vpop.permute.xlu0 %885
  %v887 = vsel %vm183, %v884, %v886
  %v888 = vsel %vm183, %v886, %v884
  %v889 = vmul.f32 %v887, %v640
  %v890 = vmul.f32 %v888, %v640
  %v891 = vadd.f32 %v881, %v889
  %v892 = vadd.f32 %v882, %v890
  %v893 = vadd.f32 %v869, %v891
  %v894 = vadd.f32 %v870, %v892
  %895 = vrot.lane.b32.xlu0 %v837, 113
  %v896 = vpop.permute.xlu0 %895
  %897 = vrot.lane.b32.xlu0 %v838, 113
  %v898 = vpop.permute.xlu0 %897
  %v899 = vsel %vm201, %v896, %v898
  %v900 = vsel %vm201, %v898, %v896
  %v901 = vmul.f32 %v899, %v657
  %v902 = vmul.f32 %v900, %v657
  %903 = vrot.lane.b32.xlu0 %v516, 112
  %v904 = vpop.permute.xlu0 %903
  %905 = vrot.lane.b32.xlu0 %v517, 112
  %v906 = vpop.permute.xlu0 %905
  %v907 = vsel %vm215, %v904, %v906
  %v908 = vsel %vm215, %v906, %v904
  %v909 = vmul.f32 %v907, %v670
  %v910 = vmul.f32 %v908, %v670
  %v911 = vadd.f32 %v901, %v909
  %v912 = vadd.f32 %v902, %v910
  %913 = vrot.lane.b32.xlu0 %v839, 111
  %v914 = vpop.permute.xlu0 %913
  %915 = vrot.lane.b32.xlu0 %v840, 111
  %v916 = vpop.permute.xlu0 %915
  %v917 = vsel %vm231, %v914, %v916
  %v918 = vsel %vm231, %v916, %v914
  %v919 = vmul.f32 %v917, %v685
  %v920 = vmul.f32 %v918, %v685
  %v921 = vadd.f32 %v911, %v919
  %v922 = vadd.f32 %v912, %v920
  %v923 = vmul.f32 %v921, %v247
  %v924 = vmul.f32 %v922, %v251
  %v925 = vadd.f32 %v893, %v923
  %v926 = vadd.f32 %v894, %v924
  %v927 = vlaneseq
  %v928 = vshrl.u32 %v927, 7
  %v929 = vsub.s32 0, %v928
  %v930 = vrot.slane %v925, %v929
  %v931 = vlaneseq
  %v932 = vshrl.u32 %v931, 7
  %v933 = vsub.s32 0, %v932
  %v934 = vrot.slane %v926, %v933
  %v935 = vmul.f32 %v930, %v706
  %v936 = vmul.f32 %v934, %v706
  %v937 = vlaneseq
  %v938 = vshrl.u32 %v937, 7
  %v939 = vsub.s32 1, %v938
  %v940 = vrot.slane %v925, %v939
  %v941 = vlaneseq
  %v942 = vshrl.u32 %v941, 7
  %v943 = vsub.s32 1, %v942
  %v944 = vrot.slane %v926, %v943
  %v945 = vmul.f32 %v940, %v721
  %v946 = vmul.f32 %v944, %v721
  %v947 = vadd.f32 %v935, %v945
  %v948 = vadd.f32 %v936, %v946
  %v949 = vlaneseq
  %v950 = vshrl.u32 %v949, 7
  %v951 = vsub.s32 2, %v950
  %v952 = vrot.slane %v925, %v951
  %v953 = vlaneseq
  %v954 = vshrl.u32 %v953, 7
  %v955 = vsub.s32 2, %v954
  %v956 = vrot.slane %v926, %v955
  %v957 = vmul.f32 %v952, %v738
  %v958 = vmul.f32 %v956, %v738
  %v959 = vadd.f32 %v947, %v957
  %v960 = vadd.f32 %v948, %v958
  %v961 = vlaneseq
  %v962 = vshrl.u32 %v961, 7
  %v963 = vsub.s32 3, %v962
  %v964 = vrot.slane %v925, %v963
  %v965 = vlaneseq
  %v966 = vshrl.u32 %v965, 7
  %v967 = vsub.s32 3, %v966
  %v968 = vrot.slane %v926, %v967
  %v969 = vmul.f32 %v964, %v755
  %v970 = vmul.f32 %v968, %v755
  %v971 = vadd.f32 %v959, %v969
  %v972 = vadd.f32 %v960, %v970
  %v973 = vlaneseq
  %v974 = vshrl.u32 %v973, 7
  %v975 = vsub.s32 4, %v974
  %v976 = vrot.slane %v925, %v975
  %v977 = vlaneseq
  %v978 = vshrl.u32 %v977, 7
  %v979 = vsub.s32 4, %v978
  %v980 = vrot.slane %v926, %v979
  %v981 = vmul.f32 %v976, %v772
  %v982 = vmul.f32 %v980, %v772
  %v983 = vadd.f32 %v971, %v981
  %v984 = vadd.f32 %v972, %v982
  %v985 = vlaneseq
  %v986 = vshrl.u32 %v985, 7
  %v987 = vsub.s32 5, %v986
  %v988 = vrot.slane %v925, %v987
  %v989 = vlaneseq
  %v990 = vshrl.u32 %v989, 7
  %v991 = vsub.s32 5, %v990
  %v992 = vrot.slane %v926, %v991
  %v993 = vmul.f32 %v988, %v789
  %v994 = vmul.f32 %v992, %v789
  %v995 = vadd.f32 %v983, %v993
  %v996 = vadd.f32 %v984, %v994
  %v997 = vlaneseq
  %v998 = vshrl.u32 %v997, 7
  %v999 = vsub.s32 6, %v998
  %v1000 = vrot.slane %v925, %v999
  %v1001 = vlaneseq
  %v1002 = vshrl.u32 %v1001, 7
  %v1003 = vsub.s32 6, %v1002
  %v1004 = vrot.slane %v926, %v1003
  %v1005 = vmul.f32 %v1000, %v806
  %v1006 = vmul.f32 %v1004, %v806
  %v1007 = vadd.f32 %v995, %v1005
  %v1008 = vadd.f32 %v996, %v1006
  %v1009 = vlaneseq
  %v1010 = vshrl.u32 %v1009, 7
  %v1011 = vsub.s32 7, %v1010
  %v1012 = vrot.slane %v925, %v1011
  %v1013 = vlaneseq
  %v1014 = vshrl.u32 %v1013, 7
  %v1015 = vsub.s32 7, %v1014
  %v1016 = vrot.slane %v926, %v1015
  %v1017 = vmul.f32 %v1012, %v823
  %v1018 = vmul.f32 %v1016, %v823
  %v1019 = vadd.f32 %v1007, %v1017
  %v1020 = vadd.f32 %v1008, %v1018
  %v1021 = vadd.f32 %v1019, %v1020
  %1022 = vadd.xlane.f32.xlu0 %v1021
  %v1023 = vpop.xlane.xlu0 %1022
  %v1024 = vmul.f32 %v1019, %v1019
  %v1025 = vmul.f32 %v1020, %v1020
  %v1026 = vadd.f32 %v1024, %v1025
  %1027 = vadd.xlane.f32.xlu0 %v1026
  %v1028 = vpop.xlane.xlu0 %1027
  %v1029 = vadd.f32 %v831, %v1023
  %v1030 = vadd.f32 %v836, %v1028
  %v1031 = vmul.f32 %v1029, 0.001953125
  %v1032 = vmul.f32 %v1030, 0.001953125
  %v1033 = vmul.f32 %v1031, %v1031
  %v1034 = vsub.f32 %v1032, %v1033
  %v1035 = vadd.f32 %v1034, 1e-05
  %v1036 = vrsqrt.pop %v1035
  %v1037 = vmul.f32 %v553, %v1036
  %v1038 = vmul.f32 %v1031, %v1037
  %v1039 = vsub.f32 %v555, %v1038
  %1041 = vset.pattern.permute.xlu0 0
  %1042 = vperm.xlu0 %1041, %v1037
  %v1043 = vpop.permute.xlu0 %1042
  %v1045 = vmul.f32 %v827, %v1043
  %v1046 = vmul.f32 %v828, %v1043
  %1048 = vset.pattern.permute.xlu0 0
  %1049 = vperm.xlu0 %1048, %v1039
  %v1050 = vpop.permute.xlu0 %1049
  %v1052 = vadd.f32 %v1045, %v1050
  %v1053 = vadd.f32 %v1046, %v1050
  %v1054 = vmax.f32 %v1052, 0.0
  %v1055 = vmax.f32 %v1053, 0.0
  %v1056 = vmul.f32 %v1019, %v1043
  %v1057 = vmul.f32 %v1020, %v1043
  %v1058 = vadd.f32 %v1056, %v1050
  %v1059 = vadd.f32 %v1057, %v1050
  %v1060 = vmax.f32 %v1058, 0.0
  %v1061 = vmax.f32 %v1059, 0.0
  %1062 = vst [vmem:[%s3] sm:$0xff] %v1054
  %1063 = vst [vmem:[%s3 + $0x8] sm:$0xff] %v1055
  %s1064 = scalar_lea.vmem %s3, 16
  %1065 = vst [vmem:[%s1064] sm:$0xff] %v1060
  %1066 = vst [vmem:[%s1064 + $0x8] sm:$0xff] %v1061
  // Predicated region
  $region14: #{dws_conv_bn_relu_block.1} parent=0 // pred_check
    _
  $region15: #{dws_conv_bn_relu_block.1} parent=0 // pred_check_branch
    %1068 = sbr.rel (0) target = $region17
  $region16: #{dws_conv_bn_relu_block.1} parent=0 // pred_region
    _
  $region17: #{dws_conv_bn_relu_block.1} parent=0 // pred_fallthru
    _
  // Predicated region
  $region18: #{dws_conv_bn_relu_block.1} parent=0 // pred_check
    _
  $region19: #{dws_conv_bn_relu_block.1} parent=0 // pred_check_branch
    %1070 = sbr.rel (0) target = $region21
  $region20: #{dws_conv_bn_relu_block.1} parent=0 // pred_region
    _
  $region21: #{dws_conv_bn_relu_block.1} parent=0 // pred_fallthru
    _

</llo_original>
